<compile_context>
chip_gen: v5e
topology: v5e:2x2
jax: 0.10.0
libtpu: 0.0.40
codegen_flags: <defaults>
</compile_context>

<pallas_src>
import math
import functools

import jax
import jax.numpy as jnp
from jax import lax
from jax.experimental import pallas as pl
from jax.experimental.pallas import tpu as pltpu


def mha_kernel(q_ref, k_ref, v_ref,
               wqkv_ref, bqkv_ref, wo_ref, bo_ref,
               o_ref,
               *scratch,
               num_heads, d_k, mxu_dtype):
    """One grid step == one batch element (mask=None path of the module).

    q_ref/k_ref/v_ref : (1, S, D) VMEM blocks.
    wqkv_ref          : (3, D, D) stacked [Wq, Wk, Wv], (D_in, D_out) layout.
    bqkv_ref          : (3, 1, D) stacked projection biases.
    wo_ref            : (D, D) output weight, (D_in, D_out) layout.
    bo_ref            : (1, D) output bias.
    o_ref             : (1, S, D) output block.
    scratch           : ((S, D) f32 accumulator,) only when d_k >= 128.
    """
    f32 = jnp.float32
    cast = lambda a: a.astype(mxu_dtype)

    _, S, D = q_ref.shape
    inv_sqrt_dk = 1.0 / math.sqrt(d_k)

    # ---- Q/K/V projections: three (S,D) @ (D,D) MXU GEMMs.  The 1/sqrt(d_k)
    # score scale is folded into the projected queries once (O(S*D) mults). ----
    qp = (jnp.dot(cast(q_ref[0]), cast(wqkv_ref[0]),
                  preferred_element_type=f32) + bqkv_ref[0]) * inv_sqrt_dk
    kp = jnp.dot(cast(k_ref[0]), cast(wqkv_ref[1]),
                 preferred_element_type=f32) + bqkv_ref[1]
    vp = jnp.dot(cast(v_ref[0]), cast(wqkv_ref[2]),
                 preferred_element_type=f32) + bqkv_ref[2]

    # TODO(synk): the optional `mask` argument of the PyTorch forward is not
    # wired in (this implements the mask=None path).
    if d_k < 128:
        # ---- Head-batched attention (small d_k).  Build (H, S, d_k) tensors
        # once, then run batched MXU matmuls for scores and P@V, and a single
        # K=D GEMM for the output projection (no per-matmul lane-narrow
        # slicing, no narrow-K output GEMMs). ----
        def heads(x):
            return jnp.stack(
                [x[:, h * d_k:(h + 1) * d_k] for h in range(num_heads)], axis=0)

        qh = heads(qp)                                          # (H, S, d_k)
        kh = heads(kp)
        vh = heads(vp)

        scores = jnp.einsum("hqd,hkd->hqk", cast(qh), cast(kh),
                            preferred_element_type=f32)         # (H, S, S)
        m = jnp.max(scores, axis=-1, keepdims=True)
        e = jnp.exp(scores - m)
        denom = jnp.sum(e, axis=-1, keepdims=True)
        attn = e * pl.reciprocal(denom, approx=True)             # f32 softmax

        ctx = jnp.einsum("hqk,hkd->hqd", cast(attn), cast(vh),
                         preferred_element_type=f32)             # (H, S, d_k)

        # Reassemble (S, D) context and do ONE full-width output GEMM (K = D).
        ctx_sd = jnp.concatenate([ctx[h] for h in range(num_heads)], axis=-1)
        out = jnp.dot(cast(ctx_sd), cast(wo_ref[...]),
                      preferred_element_type=f32) + bo_ref[...]
    else:
        # ---- Per-head path (d_k >= 128): head slices are already lane-dense;
        # fold each head's slice of the output projection into an explicit
        # VMEM scratch accumulator (deterministic spill pattern). ----
        acc_ref = scratch[0]
        acc_ref[...] = jnp.zeros_like(acc_ref)
        for h in range(num_heads):
            sl = slice(h * d_k, (h + 1) * d_k)
            qh, kh, vh = qp[:, sl], kp[:, sl], vp[:, sl]
            scores = lax.dot_general(
                cast(qh), cast(kh),
                dimension_numbers=(((1,), (1,)), ((), ())),
                preferred_element_type=f32)                      # (S, S)
            m = jnp.max(scores, axis=-1, keepdims=True)
            e = jnp.exp(scores - m)
            attn = e * pl.reciprocal(jnp.sum(e, axis=-1, keepdims=True),
                                     approx=True)
            ctx_h = jnp.dot(cast(attn), cast(vh), preferred_element_type=f32)
            acc_ref[...] += jnp.dot(cast(ctx_h), cast(wo_ref[sl, :]),
                                    preferred_element_type=f32)
        out = acc_ref[...] + bo_ref[...]

    # TODO(synk): for small D (< 128) this store is a masked vst; pad D to a
    # multiple of 128 (and slice in the wrapper) for the lane-dense fast path.
    o_ref[0] = out.astype(o_ref.dtype)


def multi_head_attention(q, k, v, params, *, num_heads, mxu_dtype=jnp.bfloat16):
    """params: dict with wq, bq, wk, bk, wv, bv, wo, bo.
    Weights are (D_in, D_out) (so x @ W + b == nn.Linear); biases are (D,).

    mxu_dtype controls the matmul *operand* dtype only (accumulation and
    softmax stay float32).  Default bfloat16 => ~4-8x MXU throughput on
    v5e/v6e/v7x; pass jnp.float32 for bit-tighter results.
    """
    B, S, D = q.shape
    assert D % num_heads == 0, "d_token is not divisible by num_heads"
    d_k = D // num_heads

    # Layout plumbing done once, outside the kernel (free).
    w_qkv = jnp.stack([params["wq"], params["wk"], params["wv"]], axis=0)           # (3, D, D)
    b_qkv = jnp.stack([params["bq"], params["bk"], params["bv"]], axis=0)[:, None]  # (3, 1, D)
    w_o = params["wo"]                                                              # (D, D)
    b_o = params["bo"].reshape(1, D)                                                # (1, D)

    kernel = functools.partial(mha_kernel, num_heads=num_heads, d_k=d_k,
                               mxu_dtype=mxu_dtype)

    # Scratch accumulator only needed by the per-head (d_k >= 128) path.
    scratch_shapes = [pltpu.VMEM((S, D), jnp.float32)] if d_k >= 128 else []

    # Explicit VMEM budget: weights/biases (allow double-buffer for the
    # fallback path), double-buffered q/k/v/out blocks, plus in-kernel temps.
    itemsize = 4
    weight_bytes = (4 * D * D + 4 * D) * itemsize * 2
    io_bytes = 4 * (S * D * itemsize) * 2
    temp_bytes = (3 * num_heads * S * S + 10 * S * D) * itemsize
    vmem_limit = int(min(max(weight_bytes + io_bytes + temp_bytes + (8 << 20),
                             32 << 20), 64 << 20))

    flops = B * (8 * S * D * D + 4 * S * S * D)
    bytes_accessed = (4 * B * S * D + 4 * D * D + 4 * D) * itemsize
    cost = pl.CostEstimate(flops=flops,
                           transcendentals=B * num_heads * S * S,
                           bytes_accessed=bytes_accessed)

    def build(single_buffer_weights):
        # Grid-invariant weights are fetched once; single-buffering halves
        # their resident VMEM footprint (they never change across grid steps).
        wkw = dict(pipeline_mode=pl.Buffered(1)) if single_buffer_weights else {}
        seq_spec = pl.BlockSpec((1, S, D), lambda b: (b, 0, 0))
        in_specs = [
            seq_spec, seq_spec, seq_spec,
            pl.BlockSpec((3, D, D), lambda b: (0, 0, 0), **wkw),
            pl.BlockSpec((3, 1, D), lambda b: (0, 0, 0), **wkw),
            pl.BlockSpec((D, D), lambda b: (0, 0), **wkw),
            pl.BlockSpec((1, D), lambda b: (0, 0), **wkw),
        ]
        # TODO(synk): for long sequences add a query-tile grid axis with online
        # (flash-style) softmax so the (S, S) score tile stays VMEM-bounded
        # (256-wide tiles on v6e/v7x, 128 on v5e) and both v7x TensorCores get
        # work even at batch=1; for D >= ~1024 stream the weights in (tk, D)
        # slabs instead of holding them resident.
        return pl.pallas_call(
            kernel,
            out_shape=jax.ShapeDtypeStruct((B, S, D), q.dtype),
            grid=(B,),                       # v7x: keep B a multiple of 2 for both TCs
            in_specs=in_specs,
            out_specs=seq_spec,
            scratch_shapes=scratch_shapes,
            compiler_params=pltpu.CompilerParams(
                dimension_semantics=("parallel",),
                vmem_limit_bytes=vmem_limit),
            cost_estimate=cost,
        )

    args = (q, k, v, w_qkv, b_qkv, w_o, b_o)
    try:
        return build(single_buffer_weights=True)(*args)
    except Exception:
        # Fallback if this JAX/Mosaic build rejects Buffered(1) on a top-level
        # pallas_call BlockSpec: default (double-buffered) weights, all other
        # optimizations kept.
        return build(single_buffer_weights=False)(*args)


def reference_mha(q, k, v, params, *, num_heads):
    """Pure-JAX reference mirroring the PyTorch forward (mask=None)."""
    B, S, D = q.shape
    d_k = D // num_heads

    def lin(x, w, b):
        return x @ w + b

    qp = lin(q, params["wq"], params["bq"]).reshape(B, S, num_heads, d_k).transpose(0, 2, 1, 3)
    kp = lin(k, params["wk"], params["bk"]).reshape(B, S, num_heads, d_k).transpose(0, 2, 1, 3)
    vp = lin(v, params["wv"], params["bv"]).reshape(B, S, num_heads, d_k).transpose(0, 2, 1, 3)

    scores = jnp.einsum("bhqd,bhkd->bhqk", qp, kp) / math.sqrt(d_k)
    attn = jax.nn.softmax(scores, axis=-1)
    x = jnp.einsum("bhqk,bhkd->bhqd", attn, vp).transpose(0, 2, 1, 3).reshape(B, S, D)
    return lin(x, params["wo"], params["bo"])


def init_params(key, d_token):
    """Deterministic init mirroring nn.Linear defaults (uniform +-1/sqrt(fan_in)).
    Weights stored as (D_in, D_out)."""
    bound = 1.0 / math.sqrt(d_token)
    names = ["wq", "bq", "wk", "bk", "wv", "bv", "wo", "bo"]
    keys = jax.random.split(key, len(names))
    params = {}
    for name, kk in zip(names, keys):
        if name.startswith("w"):
            params[name] = jax.random.uniform(
                kk, (d_token, d_token), jnp.float32, -bound, bound)
        else:
            params[name] = jax.random.uniform(
                kk, (d_token,), jnp.float32, -bound, bound)
    return params


if __name__ == "__main__":
    B, S, D, H = 2, 8, 32, 4

    root = jax.random.PRNGKey(0)
    kq, kk_, kv_, kp = jax.random.split(root, 4)
    q = jax.random.normal(kq, (B, S, D), jnp.float32)
    k = jax.random.normal(kk_, (B, S, D), jnp.float32)
    v = jax.random.normal(kv_, (B, S, D), jnp.float32)
    params = init_params(kp, D)

    ref = jax.block_until_ready(reference_mha(q, k, v, params, num_heads=H))

    # float32-operand path: tight tolerance (approx reciprocal in the softmax
    # normalization -> slightly loosened vs exact).
    out_f32 = jax.block_until_ready(
        multi_head_attention(q, k, v, params, num_heads=H, mxu_dtype=jnp.float32))
    assert out_f32.shape == (B, S, D)
    err_f32 = float(jnp.max(jnp.abs(out_f32 - ref)))
    assert jnp.allclose(out_f32, ref, atol=2e-3, rtol=2e-3), \
        f"f32 path mismatch vs reference (max abs err {err_f32})"

    # default bfloat16-operand path (f32 accumulation / f32 softmax): looser tol.
    out_bf16 = jax.block_until_ready(
        multi_head_attention(q, k, v, params, num_heads=H))
    assert out_bf16.shape == (B, S, D)
    err_bf16 = float(jnp.max(jnp.abs(out_bf16 - ref)))
    assert jnp.allclose(out_bf16, ref, atol=8e-2, rtol=8e-2), \
        f"bf16 path mismatch vs reference (max abs err {err_bf16})"

    print("KERNEL_OK")
</pallas_src>

<mosaic_0001>
module attributes {stable_mosaic.version = 11 : i64} {
  func.func @mha_kernel(%arg0: i32, %arg1: memref<1x8x32xf32, #tpu.memory_space<vmem>>, %arg2: memref<1x8x32xf32, #tpu.memory_space<vmem>>, %arg3: memref<1x8x32xf32, #tpu.memory_space<vmem>>, %arg4: memref<3x32x32xf32, #tpu.memory_space<vmem>>, %arg5: memref<3x1x32xf32, #tpu.memory_space<vmem>>, %arg6: memref<32x32xf32, #tpu.memory_space<vmem>>, %arg7: memref<1x32xf32, #tpu.memory_space<vmem>>, %arg8: memref<1x8x32xf32, #tpu.memory_space<vmem>>) attributes {dimension_semantics = [#tpu.dimension_semantics<parallel>], iteration_bounds = array<i64: 2>, scalar_prefetch = 0 : i64, scratch_operands = 0 : i64, tpu.core_type = #tpu.core_type<tc>, window_params = [{transform_indices = @transform_0, window_bounds = array<i64: 1, 8, 32>}, {transform_indices = @transform_1, window_bounds = array<i64: 1, 8, 32>}, {transform_indices = @transform_2, window_bounds = array<i64: 1, 8, 32>}, {pipeline_mode = #tpu.pipeline_mode<synchronous>, transform_indices = @transform_3, window_bounds = array<i64: 3, 32, 32>}, {pipeline_mode = #tpu.pipeline_mode<synchronous>, transform_indices = @transform_4, window_bounds = array<i64: 3, 1, 32>}, {pipeline_mode = #tpu.pipeline_mode<synchronous>, transform_indices = @transform_5, window_bounds = array<i64: 32, 32>}, {pipeline_mode = #tpu.pipeline_mode<synchronous>, transform_indices = @transform_6, window_bounds = array<i64: 1, 32>}, {transform_indices = @transform_7, window_bounds = array<i64: 1, 8, 32>}]} {
    %c0 = arith.constant 0 : index
    %c0_0 = arith.constant 0 : index
    %c0_1 = arith.constant 0 : index
    %0 = vector.load %arg1[%c0, %c0_0, %c0_1] : memref<1x8x32xf32, #tpu.memory_space<vmem>>, vector<1x8x32xf32>
    %1 = vector.shape_cast %0 : vector<1x8x32xf32> to vector<8x32xf32>
    %c0_2 = arith.constant 0 : index
    %c0_3 = arith.constant 0 : index
    %c0_4 = arith.constant 0 : index
    %2 = vector.load %arg4[%c0_2, %c0_3, %c0_4] : memref<3x32x32xf32, #tpu.memory_space<vmem>>, vector<1x32x32xf32>
    %3 = vector.shape_cast %2 : vector<1x32x32xf32> to vector<32x32xf32>
    %cst = arith.constant dense<0.000000e+00> : vector<8x32xf32>
    %4 = tpu.matmul %1, %3, %cst {dimension_numbers = #tpu.dot_dimension_numbers<[1], [0], [0], [1], [0, 0, 1, 1], [], []>} : vector<8x32xf32>, vector<32x32xf32>, vector<8x32xf32> -> vector<8x32xf32>
    %c0_5 = arith.constant 0 : index
    %c0_6 = arith.constant 0 : index
    %c0_7 = arith.constant 0 : index
    %5 = vector.load %arg5[%c0_5, %c0_6, %c0_7] : memref<3x1x32xf32, #tpu.memory_space<vmem>>, vector<1x1x32xf32>
    %6 = vector.shape_cast %5 : vector<1x1x32xf32> to vector<1x32xf32>
    %7 = vector.broadcast %6 : vector<1x32xf32> to vector<8x32xf32>
    %8 = arith.addf %4, %7 : vector<8x32xf32>
    %cst_8 = arith.constant 0.353553385 : f32
    %9 = vector.broadcast %cst_8 : f32 to vector<8x32xf32>
    %10 = arith.mulf %8, %9 : vector<8x32xf32>
    %c0_9 = arith.constant 0 : index
    %c0_10 = arith.constant 0 : index
    %c0_11 = arith.constant 0 : index
    %11 = vector.load %arg2[%c0_9, %c0_10, %c0_11] : memref<1x8x32xf32, #tpu.memory_space<vmem>>, vector<1x8x32xf32>
    %12 = vector.shape_cast %11 : vector<1x8x32xf32> to vector<8x32xf32>
    %c1 = arith.constant 1 : index
    %c0_12 = arith.constant 0 : index
    %c0_13 = arith.constant 0 : index
    %13 = vector.load %arg4[%c1, %c0_12, %c0_13] : memref<3x32x32xf32, #tpu.memory_space<vmem>>, vector<1x32x32xf32>
    %14 = vector.shape_cast %13 : vector<1x32x32xf32> to vector<32x32xf32>
    %cst_14 = arith.constant dense<0.000000e+00> : vector<8x32xf32>
    %15 = tpu.matmul %12, %14, %cst_14 {dimension_numbers = #tpu.dot_dimension_numbers<[1], [0], [0], [1], [0, 0, 1, 1], [], []>} : vector<8x32xf32>, vector<32x32xf32>, vector<8x32xf32> -> vector<8x32xf32>
    %c1_15 = arith.constant 1 : index
    %c0_16 = arith.constant 0 : index
    %c0_17 = arith.constant 0 : index
    %16 = vector.load %arg5[%c1_15, %c0_16, %c0_17] : memref<3x1x32xf32, #tpu.memory_space<vmem>>, vector<1x1x32xf32>
    %17 = vector.shape_cast %16 : vector<1x1x32xf32> to vector<1x32xf32>
    %18 = vector.broadcast %17 : vector<1x32xf32> to vector<8x32xf32>
    %19 = arith.addf %15, %18 : vector<8x32xf32>
    %c0_18 = arith.constant 0 : index
    %c0_19 = arith.constant 0 : index
    %c0_20 = arith.constant 0 : index
    %20 = vector.load %arg3[%c0_18, %c0_19, %c0_20] : memref<1x8x32xf32, #tpu.memory_space<vmem>>, vector<1x8x32xf32>
    %21 = vector.shape_cast %20 : vector<1x8x32xf32> to vector<8x32xf32>
    %c2 = arith.constant 2 : index
    %c0_21 = arith.constant 0 : index
    %c0_22 = arith.constant 0 : index
    %22 = vector.load %arg4[%c2, %c0_21, %c0_22] : memref<3x32x32xf32, #tpu.memory_space<vmem>>, vector<1x32x32xf32>
    %23 = vector.shape_cast %22 : vector<1x32x32xf32> to vector<32x32xf32>
    %cst_23 = arith.constant dense<0.000000e+00> : vector<8x32xf32>
    %24 = tpu.matmul %21, %23, %cst_23 {dimension_numbers = #tpu.dot_dimension_numbers<[1], [0], [0], [1], [0, 0, 1, 1], [], []>} : vector<8x32xf32>, vector<32x32xf32>, vector<8x32xf32> -> vector<8x32xf32>
    %c2_24 = arith.constant 2 : index
    %c0_25 = arith.constant 0 : index
    %c0_26 = arith.constant 0 : index
    %25 = vector.load %arg5[%c2_24, %c0_25, %c0_26] : memref<3x1x32xf32, #tpu.memory_space<vmem>>, vector<1x1x32xf32>
    %26 = vector.shape_cast %25 : vector<1x1x32xf32> to vector<1x32xf32>
    %27 = vector.broadcast %26 : vector<1x32xf32> to vector<8x32xf32>
    %28 = arith.addf %24, %27 : vector<8x32xf32>
    %29 = vector.extract_strided_slice %10 {offsets = [0, 0], sizes = [8, 8], strides = [1, 1]} : vector<8x32xf32> to vector<8x8xf32>
    %30 = vector.extract_strided_slice %10 {offsets = [0, 8], sizes = [8, 8], strides = [1, 1]} : vector<8x32xf32> to vector<8x8xf32>
    %31 = vector.extract_strided_slice %10 {offsets = [0, 16], sizes = [8, 8], strides = [1, 1]} : vector<8x32xf32> to vector<8x8xf32>
    %32 = vector.extract_strided_slice %10 {offsets = [0, 24], sizes = [8, 8], strides = [1, 1]} : vector<8x32xf32> to vector<8x8xf32>
    %33 = vector.shape_cast %29 : vector<8x8xf32> to vector<1x8x8xf32>
    %34 = vector.shape_cast %30 : vector<8x8xf32> to vector<1x8x8xf32>
    %35 = vector.shape_cast %31 : vector<8x8xf32> to vector<1x8x8xf32>
    %36 = vector.shape_cast %32 : vector<8x8xf32> to vector<1x8x8xf32>
    %37 = tpu.concatenate %33, %34, %35, %36 in 0 : vector<1x8x8xf32>, vector<1x8x8xf32>, vector<1x8x8xf32>, vector<1x8x8xf32> -> vector<4x8x8xf32>
    %38 = vector.extract_strided_slice %19 {offsets = [0, 0], sizes = [8, 8], strides = [1, 1]} : vector<8x32xf32> to vector<8x8xf32>
    %39 = vector.extract_strided_slice %19 {offsets = [0, 8], sizes = [8, 8], strides = [1, 1]} : vector<8x32xf32> to vector<8x8xf32>
    %40 = vector.extract_strided_slice %19 {offsets = [0, 16], sizes = [8, 8], strides = [1, 1]} : vector<8x32xf32> to vector<8x8xf32>
    %41 = vector.extract_strided_slice %19 {offsets = [0, 24], sizes = [8, 8], strides = [1, 1]} : vector<8x32xf32> to vector<8x8xf32>
    %42 = vector.shape_cast %38 : vector<8x8xf32> to vector<1x8x8xf32>
    %43 = vector.shape_cast %39 : vector<8x8xf32> to vector<1x8x8xf32>
    %44 = vector.shape_cast %40 : vector<8x8xf32> to vector<1x8x8xf32>
    %45 = vector.shape_cast %41 : vector<8x8xf32> to vector<1x8x8xf32>
    %46 = tpu.concatenate %42, %43, %44, %45 in 0 : vector<1x8x8xf32>, vector<1x8x8xf32>, vector<1x8x8xf32>, vector<1x8x8xf32> -> vector<4x8x8xf32>
    %47 = vector.extract_strided_slice %28 {offsets = [0, 0], sizes = [8, 8], strides = [1, 1]} : vector<8x32xf32> to vector<8x8xf32>
    %48 = vector.extract_strided_slice %28 {offsets = [0, 8], sizes = [8, 8], strides = [1, 1]} : vector<8x32xf32> to vector<8x8xf32>
    %49 = vector.extract_strided_slice %28 {offsets = [0, 16], sizes = [8, 8], strides = [1, 1]} : vector<8x32xf32> to vector<8x8xf32>
    %50 = vector.extract_strided_slice %28 {offsets = [0, 24], sizes = [8, 8], strides = [1, 1]} : vector<8x32xf32> to vector<8x8xf32>
    %51 = vector.shape_cast %47 : vector<8x8xf32> to vector<1x8x8xf32>
    %52 = vector.shape_cast %48 : vector<8x8xf32> to vector<1x8x8xf32>
    %53 = vector.shape_cast %49 : vector<8x8xf32> to vector<1x8x8xf32>
    %54 = vector.shape_cast %50 : vector<8x8xf32> to vector<1x8x8xf32>
    %55 = tpu.concatenate %51, %52, %53, %54 in 0 : vector<1x8x8xf32>, vector<1x8x8xf32>, vector<1x8x8xf32>, vector<1x8x8xf32> -> vector<4x8x8xf32>
    "tpu.trace_start"() <{level = 10 : i32, message = "hqd,hkd->hqk"}> : () -> ()
    %cst_27 = arith.constant dense<0.000000e+00> : vector<4x8x8xf32>
    %56 = tpu.matmul %37, %46, %cst_27 {dimension_numbers = #tpu.dot_dimension_numbers<[2], [2], [1], [1], [0, 0, 0, 1, 1, 1], [0], [0]>} : vector<4x8x8xf32>, vector<4x8x8xf32>, vector<4x8x8xf32> -> vector<4x8x8xf32>
    "tpu.trace_stop"() : () -> ()
    %cst_28 = arith.constant dense<0xFF800000> : vector<4x8xf32>
    %57 = vector.multi_reduction <maximumf>, %56, %cst_28 [2] : vector<4x8x8xf32> to vector<4x8xf32>
    %58 = vector.shape_cast %57 : vector<4x8xf32> to vector<4x8x1xf32>
    %59 = vector.broadcast %58 : vector<4x8x1xf32> to vector<4x8x8xf32>
    %60 = arith.subf %56, %59 : vector<4x8x8xf32>
    %61 = math.exp %60 : vector<4x8x8xf32>
    %cst_29 = arith.constant dense<0.000000e+00> : vector<4x8xf32>
    %62 = vector.multi_reduction <add>, %61, %cst_29 [2] : vector<4x8x8xf32> to vector<4x8xf32>
    %63 = vector.shape_cast %62 : vector<4x8xf32> to vector<4x8x1xf32>
    %64 = tpu.reciprocal %63 {approx = true} : vector<4x8x1xf32> -> vector<4x8x1xf32>
    %65 = vector.broadcast %64 : vector<4x8x1xf32> to vector<4x8x8xf32>
    %66 = arith.mulf %61, %65 : vector<4x8x8xf32>
    "tpu.trace_start"() <{level = 10 : i32, message = "hqk,hkd->hqd"}> : () -> ()
    %cst_30 = arith.constant dense<0.000000e+00> : vector<4x8x8xf32>
    %67 = tpu.matmul %66, %55, %cst_30 {dimension_numbers = #tpu.dot_dimension_numbers<[2], [1], [1], [2], [0, 0, 0, 1, 1, 2], [0], [0]>} : vector<4x8x8xf32>, vector<4x8x8xf32>, vector<4x8x8xf32> -> vector<4x8x8xf32>
    "tpu.trace_stop"() : () -> ()
    %68 = vector.extract_strided_slice %67 {offsets = [0, 0, 0], sizes = [1, 8, 8], strides = [1, 1, 1]} : vector<4x8x8xf32> to vector<1x8x8xf32>
    %69 = vector.shape_cast %68 : vector<1x8x8xf32> to vector<8x8xf32>
    %70 = vector.extract_strided_slice %67 {offsets = [1, 0, 0], sizes = [1, 8, 8], strides = [1, 1, 1]} : vector<4x8x8xf32> to vector<1x8x8xf32>
    %71 = vector.shape_cast %70 : vector<1x8x8xf32> to vector<8x8xf32>
    %72 = vector.extract_strided_slice %67 {offsets = [2, 0, 0], sizes = [1, 8, 8], strides = [1, 1, 1]} : vector<4x8x8xf32> to vector<1x8x8xf32>
    %73 = vector.shape_cast %72 : vector<1x8x8xf32> to vector<8x8xf32>
    %74 = vector.extract_strided_slice %67 {offsets = [3, 0, 0], sizes = [1, 8, 8], strides = [1, 1, 1]} : vector<4x8x8xf32> to vector<1x8x8xf32>
    %75 = vector.shape_cast %74 : vector<1x8x8xf32> to vector<8x8xf32>
    %76 = tpu.concatenate %69, %71, %73, %75 in 1 : vector<8x8xf32>, vector<8x8xf32>, vector<8x8xf32>, vector<8x8xf32> -> vector<8x32xf32>
    %c0_31 = arith.constant 0 : index
    %c0_32 = arith.constant 0 : index
    %77 = vector.load %arg6[%c0_31, %c0_32] : memref<32x32xf32, #tpu.memory_space<vmem>>, vector<32x32xf32>
    %cst_33 = arith.constant dense<0.000000e+00> : vector<8x32xf32>
    %78 = tpu.matmul %76, %77, %cst_33 {dimension_numbers = #tpu.dot_dimension_numbers<[1], [0], [0], [1], [0, 0, 1, 1], [], []>} : vector<8x32xf32>, vector<32x32xf32>, vector<8x32xf32> -> vector<8x32xf32>
    %c0_34 = arith.constant 0 : index
    %c0_35 = arith.constant 0 : index
    %79 = vector.load %arg7[%c0_34, %c0_35] : memref<1x32xf32, #tpu.memory_space<vmem>>, vector<1x32xf32>
    %80 = vector.broadcast %79 : vector<1x32xf32> to vector<8x32xf32>
    %81 = arith.addf %78, %80 : vector<8x32xf32>
    %c0_36 = arith.constant 0 : index
    %c0_37 = arith.constant 0 : index
    %c0_38 = arith.constant 0 : index
    %82 = vector.load %arg8[%c0_36, %c0_37, %c0_38] : memref<1x8x32xf32, #tpu.memory_space<vmem>>, vector<1x8x32xf32>
    %83 = vector.shape_cast %82 : vector<1x8x32xf32> to vector<8x32xf32>
    %84 = vector.shape_cast %81 : vector<8x32xf32> to vector<1x8x32xf32>
    tpu.vector_store %arg8[%c0_36, %c0_37, %c0_38], %84 {strides = array<i32>} : memref<1x8x32xf32, #tpu.memory_space<vmem>>, vector<1x8x32xf32>,
    return
  }
  func.func @transform_0(%arg0: i32) -> (i32, i32, i32) {
    %c0_i32 = arith.constant 0 : i32
    %c0_i32_0 = arith.constant 0 : i32
    %c0_i32_1 = arith.constant 0 : i32
    return %arg0, %c0_i32, %c0_i32_0 : i32, i32, i32
  }
  func.func @transform_1(%arg0: i32) -> (i32, i32, i32) {
    %c0_i32 = arith.constant 0 : i32
    %c0_i32_0 = arith.constant 0 : i32
    %c0_i32_1 = arith.constant 0 : i32
    return %arg0, %c0_i32, %c0_i32_0 : i32, i32, i32
  }
  func.func @transform_2(%arg0: i32) -> (i32, i32, i32) {
    %c0_i32 = arith.constant 0 : i32
    %c0_i32_0 = arith.constant 0 : i32
    %c0_i32_1 = arith.constant 0 : i32
    return %arg0, %c0_i32, %c0_i32_0 : i32, i32, i32
  }
  func.func @transform_3(%arg0: i32) -> (i32, i32, i32) {
    %c0_i32 = arith.constant 0 : i32
    %c0_i32_0 = arith.constant 0 : i32
    %c0_i32_1 = arith.constant 0 : i32
    %c0_i32_2 = arith.constant 0 : i32
    return %c0_i32, %c0_i32_0, %c0_i32_1 : i32, i32, i32
  }
  func.func @transform_4(%arg0: i32) -> (i32, i32, i32) {
    %c0_i32 = arith.constant 0 : i32
    %c0_i32_0 = arith.constant 0 : i32
    %c0_i32_1 = arith.constant 0 : i32
    %c0_i32_2 = arith.constant 0 : i32
    return %c0_i32, %c0_i32_0, %c0_i32_1 : i32, i32, i32
  }
  func.func @transform_5(%arg0: i32) -> (i32, i32) {
    %c0_i32 = arith.constant 0 : i32
    %c0_i32_0 = arith.constant 0 : i32
    %c0_i32_1 = arith.constant 0 : i32
    return %c0_i32, %c0_i32_0 : i32, i32
  }
  func.func @transform_6(%arg0: i32) -> (i32, i32) {
    %c0_i32 = arith.constant 0 : i32
    %c0_i32_0 = arith.constant 0 : i32
    %c0_i32_1 = arith.constant 0 : i32
    return %c0_i32, %c0_i32_0 : i32, i32
  }
  func.func @transform_7(%arg0: i32) -> (i32, i32, i32) {
    %c0_i32 = arith.constant 0 : i32
    %c0_i32_0 = arith.constant 0 : i32
    %c0_i32_1 = arith.constant 0 : i32
    return %arg0, %c0_i32, %c0_i32_0 : i32, i32, i32
  }
}

module attributes {stable_mosaic.version = 11 : i64} {
  func.func @mha_kernel(%arg0: i32, %arg1: memref<1x8x32xf32, #tpu.memory_space<vmem>>, %arg2: memref<1x8x32xf32, #tpu.memory_space<vmem>>, %arg3: memref<1x8x32xf32, #tpu.memory_space<vmem>>, %arg4: memref<3x32x32xf32, #tpu.memory_space<vmem>>, %arg5: memref<3x1x32xf32, #tpu.memory_space<vmem>>, %arg6: memref<32x32xf32, #tpu.memory_space<vmem>>, %arg7: memref<1x32xf32, #tpu.memory_space<vmem>>, %arg8: memref<1x8x32xf32, #tpu.memory_space<vmem>>) attributes {dimension_semantics = [#tpu.dimension_semantics<parallel>], iteration_bounds = array<i64: 2>, scalar_prefetch = 0 : i64, scratch_operands = 0 : i64, tpu.core_type = #tpu.core_type<tc>, window_params = [{transform_indices = @transform_0, window_bounds = array<i64: 1, 8, 32>}, {transform_indices = @transform_1, window_bounds = array<i64: 1, 8, 32>}, {transform_indices = @transform_2, window_bounds = array<i64: 1, 8, 32>}, {pipeline_mode = #tpu.pipeline_mode<synchronous>, transform_indices = @transform_3, window_bounds = array<i64: 3, 32, 32>}, {pipeline_mode = #tpu.pipeline_mode<synchronous>, transform_indices = @transform_4, window_bounds = array<i64: 3, 1, 32>}, {pipeline_mode = #tpu.pipeline_mode<synchronous>, transform_indices = @transform_5, window_bounds = array<i64: 32, 32>}, {pipeline_mode = #tpu.pipeline_mode<synchronous>, transform_indices = @transform_6, window_bounds = array<i64: 1, 32>}, {transform_indices = @transform_7, window_bounds = array<i64: 1, 8, 32>}]} {
    %c0 = arith.constant 0 : index
    %c0_0 = arith.constant 0 : index
    %c0_1 = arith.constant 0 : index
    %0 = vector.load %arg1[%c0, %c0_0, %c0_1] : memref<1x8x32xf32, #tpu.memory_space<vmem>>, vector<1x8x32xf32>
    %1 = vector.shape_cast %0 : vector<1x8x32xf32> to vector<8x32xf32>
    %c0_2 = arith.constant 0 : index
    %c0_3 = arith.constant 0 : index
    %c0_4 = arith.constant 0 : index
    %2 = vector.load %arg4[%c0_2, %c0_3, %c0_4] : memref<3x32x32xf32, #tpu.memory_space<vmem>>, vector<1x32x32xf32>
    %3 = vector.shape_cast %2 : vector<1x32x32xf32> to vector<32x32xf32>
    %cst = arith.constant dense<0.000000e+00> : vector<8x32xf32>
    %4 = tpu.matmul %1, %3, %cst {dimension_numbers = #tpu.dot_dimension_numbers<[1], [0], [0], [1], [0, 0, 1, 1], [], []>} : vector<8x32xf32>, vector<32x32xf32>, vector<8x32xf32> -> vector<8x32xf32>
    %c0_5 = arith.constant 0 : index
    %c0_6 = arith.constant 0 : index
    %c0_7 = arith.constant 0 : index
    %5 = vector.load %arg5[%c0_5, %c0_6, %c0_7] : memref<3x1x32xf32, #tpu.memory_space<vmem>>, vector<1x1x32xf32>
    %6 = vector.shape_cast %5 : vector<1x1x32xf32> to vector<1x32xf32>
    %7 = vector.broadcast %6 : vector<1x32xf32> to vector<8x32xf32>
    %8 = arith.addf %4, %7 : vector<8x32xf32>
    %cst_8 = arith.constant 0.353553385 : f32
    %9 = vector.broadcast %cst_8 : f32 to vector<8x32xf32>
    %10 = arith.mulf %8, %9 : vector<8x32xf32>
    %c0_9 = arith.constant 0 : index
    %c0_10 = arith.constant 0 : index
    %c0_11 = arith.constant 0 : index
    %11 = vector.load %arg2[%c0_9, %c0_10, %c0_11] : memref<1x8x32xf32, #tpu.memory_space<vmem>>, vector<1x8x32xf32>
    %12 = vector.shape_cast %11 : vector<1x8x32xf32> to vector<8x32xf32>
    %c1 = arith.constant 1 : index
    %c0_12 = arith.constant 0 : index
    %c0_13 = arith.constant 0 : index
    %13 = vector.load %arg4[%c1, %c0_12, %c0_13] : memref<3x32x32xf32, #tpu.memory_space<vmem>>, vector<1x32x32xf32>
    %14 = vector.shape_cast %13 : vector<1x32x32xf32> to vector<32x32xf32>
    %cst_14 = arith.constant dense<0.000000e+00> : vector<8x32xf32>
    %15 = tpu.matmul %12, %14, %cst_14 {dimension_numbers = #tpu.dot_dimension_numbers<[1], [0], [0], [1], [0, 0, 1, 1], [], []>} : vector<8x32xf32>, vector<32x32xf32>, vector<8x32xf32> -> vector<8x32xf32>
    %c1_15 = arith.constant 1 : index
    %c0_16 = arith.constant 0 : index
    %c0_17 = arith.constant 0 : index
    %16 = vector.load %arg5[%c1_15, %c0_16, %c0_17] : memref<3x1x32xf32, #tpu.memory_space<vmem>>, vector<1x1x32xf32>
    %17 = vector.shape_cast %16 : vector<1x1x32xf32> to vector<1x32xf32>
    %18 = vector.broadcast %17 : vector<1x32xf32> to vector<8x32xf32>
    %19 = arith.addf %15, %18 : vector<8x32xf32>
    %c0_18 = arith.constant 0 : index
    %c0_19 = arith.constant 0 : index
    %c0_20 = arith.constant 0 : index
    %20 = vector.load %arg3[%c0_18, %c0_19, %c0_20] : memref<1x8x32xf32, #tpu.memory_space<vmem>>, vector<1x8x32xf32>
    %21 = vector.shape_cast %20 : vector<1x8x32xf32> to vector<8x32xf32>
    %c2 = arith.constant 2 : index
    %c0_21 = arith.constant 0 : index
    %c0_22 = arith.constant 0 : index
    %22 = vector.load %arg4[%c2, %c0_21, %c0_22] : memref<3x32x32xf32, #tpu.memory_space<vmem>>, vector<1x32x32xf32>
    %23 = vector.shape_cast %22 : vector<1x32x32xf32> to vector<32x32xf32>
    %cst_23 = arith.constant dense<0.000000e+00> : vector<8x32xf32>
    %24 = tpu.matmul %21, %23, %cst_23 {dimension_numbers = #tpu.dot_dimension_numbers<[1], [0], [0], [1], [0, 0, 1, 1], [], []>} : vector<8x32xf32>, vector<32x32xf32>, vector<8x32xf32> -> vector<8x32xf32>
    %c2_24 = arith.constant 2 : index
    %c0_25 = arith.constant 0 : index
    %c0_26 = arith.constant 0 : index
    %25 = vector.load %arg5[%c2_24, %c0_25, %c0_26] : memref<3x1x32xf32, #tpu.memory_space<vmem>>, vector<1x1x32xf32>
    %26 = vector.shape_cast %25 : vector<1x1x32xf32> to vector<1x32xf32>
    %27 = vector.broadcast %26 : vector<1x32xf32> to vector<8x32xf32>
    %28 = arith.addf %24, %27 : vector<8x32xf32>
    %29 = vector.extract_strided_slice %10 {offsets = [0, 0], sizes = [8, 8], strides = [1, 1]} : vector<8x32xf32> to vector<8x8xf32>
    %30 = vector.extract_strided_slice %10 {offsets = [0, 8], sizes = [8, 8], strides = [1, 1]} : vector<8x32xf32> to vector<8x8xf32>
    %31 = vector.extract_strided_slice %10 {offsets = [0, 16], sizes = [8, 8], strides = [1, 1]} : vector<8x32xf32> to vector<8x8xf32>
    %32 = vector.extract_strided_slice %10 {offsets = [0, 24], sizes = [8, 8], strides = [1, 1]} : vector<8x32xf32> to vector<8x8xf32>
    %33 = vector.shape_cast %29 : vector<8x8xf32> to vector<1x8x8xf32>
    %34 = vector.shape_cast %30 : vector<8x8xf32> to vector<1x8x8xf32>
    %35 = vector.shape_cast %31 : vector<8x8xf32> to vector<1x8x8xf32>
    %36 = vector.shape_cast %32 : vector<8x8xf32> to vector<1x8x8xf32>
    %37 = tpu.concatenate %33, %34, %35, %36 in 0 : vector<1x8x8xf32>, vector<1x8x8xf32>, vector<1x8x8xf32>, vector<1x8x8xf32> -> vector<4x8x8xf32>
    %38 = vector.extract_strided_slice %19 {offsets = [0, 0], sizes = [8, 8], strides = [1, 1]} : vector<8x32xf32> to vector<8x8xf32>
    %39 = vector.extract_strided_slice %19 {offsets = [0, 8], sizes = [8, 8], strides = [1, 1]} : vector<8x32xf32> to vector<8x8xf32>
    %40 = vector.extract_strided_slice %19 {offsets = [0, 16], sizes = [8, 8], strides = [1, 1]} : vector<8x32xf32> to vector<8x8xf32>
    %41 = vector.extract_strided_slice %19 {offsets = [0, 24], sizes = [8, 8], strides = [1, 1]} : vector<8x32xf32> to vector<8x8xf32>
    %42 = vector.shape_cast %38 : vector<8x8xf32> to vector<1x8x8xf32>
    %43 = vector.shape_cast %39 : vector<8x8xf32> to vector<1x8x8xf32>
    %44 = vector.shape_cast %40 : vector<8x8xf32> to vector<1x8x8xf32>
    %45 = vector.shape_cast %41 : vector<8x8xf32> to vector<1x8x8xf32>
    %46 = tpu.concatenate %42, %43, %44, %45 in 0 : vector<1x8x8xf32>, vector<1x8x8xf32>, vector<1x8x8xf32>, vector<1x8x8xf32> -> vector<4x8x8xf32>
    %47 = vector.extract_strided_slice %28 {offsets = [0, 0], sizes = [8, 8], strides = [1, 1]} : vector<8x32xf32> to vector<8x8xf32>
    %48 = vector.extract_strided_slice %28 {offsets = [0, 8], sizes = [8, 8], strides = [1, 1]} : vector<8x32xf32> to vector<8x8xf32>
    %49 = vector.extract_strided_slice %28 {offsets = [0, 16], sizes = [8, 8], strides = [1, 1]} : vector<8x32xf32> to vector<8x8xf32>
    %50 = vector.extract_strided_slice %28 {offsets = [0, 24], sizes = [8, 8], strides = [1, 1]} : vector<8x32xf32> to vector<8x8xf32>
    %51 = vector.shape_cast %47 : vector<8x8xf32> to vector<1x8x8xf32>
    %52 = vector.shape_cast %48 : vector<8x8xf32> to vector<1x8x8xf32>
    %53 = vector.shape_cast %49 : vector<8x8xf32> to vector<1x8x8xf32>
    %54 = vector.shape_cast %50 : vector<8x8xf32> to vector<1x8x8xf32>
    %55 = tpu.concatenate %51, %52, %53, %54 in 0 : vector<1x8x8xf32>, vector<1x8x8xf32>, vector<1x8x8xf32>, vector<1x8x8xf32> -> vector<4x8x8xf32>
    "tpu.trace_start"() <{level = 10 : i32, message = "hqd,hkd->hqk"}> : () -> ()
    %cst_27 = arith.constant dense<0.000000e+00> : vector<4x8x8xf32>
    %56 = tpu.matmul %37, %46, %cst_27 {dimension_numbers = #tpu.dot_dimension_numbers<[2], [2], [1], [1], [0, 0, 0, 1, 1, 1], [0], [0]>} : vector<4x8x8xf32>, vector<4x8x8xf32>, vector<4x8x8xf32> -> vector<4x8x8xf32>
    "tpu.trace_stop"() : () -> ()
    %cst_28 = arith.constant dense<0xFF800000> : vector<4x8xf32>
    %57 = vector.multi_reduction <maximumf>, %56, %cst_28 [2] : vector<4x8x8xf32> to vector<4x8xf32>
    %58 = vector.shape_cast %57 : vector<4x8xf32> to vector<4x8x1xf32>
    %59 = vector.broadcast %58 : vector<4x8x1xf32> to vector<4x8x8xf32>
    %60 = arith.subf %56, %59 : vector<4x8x8xf32>
    %61 = math.exp %60 : vector<4x8x8xf32>
    %cst_29 = arith.constant dense<0.000000e+00> : vector<4x8xf32>
    %62 = vector.multi_reduction <add>, %61, %cst_29 [2] : vector<4x8x8xf32> to vector<4x8xf32>
    %63 = vector.shape_cast %62 : vector<4x8xf32> to vector<4x8x1xf32>
    %64 = tpu.reciprocal %63 {approx = true} : vector<4x8x1xf32> -> vector<4x8x1xf32>
    %65 = vector.broadcast %64 : vector<4x8x1xf32> to vector<4x8x8xf32>
    %66 = arith.mulf %61, %65 : vector<4x8x8xf32>
    "tpu.trace_start"() <{level = 10 : i32, message = "hqk,hkd->hqd"}> : () -> ()
    %cst_30 = arith.constant dense<0.000000e+00> : vector<4x8x8xf32>
    %67 = tpu.matmul %66, %55, %cst_30 {dimension_numbers = #tpu.dot_dimension_numbers<[2], [1], [1], [2], [0, 0, 0, 1, 1, 2], [0], [0]>} : vector<4x8x8xf32>, vector<4x8x8xf32>, vector<4x8x8xf32> -> vector<4x8x8xf32>
    "tpu.trace_stop"() : () -> ()
    %68 = vector.extract_strided_slice %67 {offsets = [0, 0, 0], sizes = [1, 8, 8], strides = [1, 1, 1]} : vector<4x8x8xf32> to vector<1x8x8xf32>
    %69 = vector.shape_cast %68 : vector<1x8x8xf32> to vector<8x8xf32>
    %70 = vector.extract_strided_slice %67 {offsets = [1, 0, 0], sizes = [1, 8, 8], strides = [1, 1, 1]} : vector<4x8x8xf32> to vector<1x8x8xf32>
    %71 = vector.shape_cast %70 : vector<1x8x8xf32> to vector<8x8xf32>
    %72 = vector.extract_strided_slice %67 {offsets = [2, 0, 0], sizes = [1, 8, 8], strides = [1, 1, 1]} : vector<4x8x8xf32> to vector<1x8x8xf32>
    %73 = vector.shape_cast %72 : vector<1x8x8xf32> to vector<8x8xf32>
    %74 = vector.extract_strided_slice %67 {offsets = [3, 0, 0], sizes = [1, 8, 8], strides = [1, 1, 1]} : vector<4x8x8xf32> to vector<1x8x8xf32>
    %75 = vector.shape_cast %74 : vector<1x8x8xf32> to vector<8x8xf32>
    %76 = tpu.concatenate %69, %71, %73, %75 in 1 : vector<8x8xf32>, vector<8x8xf32>, vector<8x8xf32>, vector<8x8xf32> -> vector<8x32xf32>
    %c0_31 = arith.constant 0 : index
    %c0_32 = arith.constant 0 : index
    %77 = vector.load %arg6[%c0_31, %c0_32] : memref<32x32xf32, #tpu.memory_space<vmem>>, vector<32x32xf32>
    %cst_33 = arith.constant dense<0.000000e+00> : vector<8x32xf32>
    %78 = tpu.matmul %76, %77, %cst_33 {dimension_numbers = #tpu.dot_dimension_numbers<[1], [0], [0], [1], [0, 0, 1, 1], [], []>} : vector<8x32xf32>, vector<32x32xf32>, vector<8x32xf32> -> vector<8x32xf32>
    %c0_34 = arith.constant 0 : index
    %c0_35 = arith.constant 0 : index
    %79 = vector.load %arg7[%c0_34, %c0_35] : memref<1x32xf32, #tpu.memory_space<vmem>>, vector<1x32xf32>
    %80 = vector.broadcast %79 : vector<1x32xf32> to vector<8x32xf32>
    %81 = arith.addf %78, %80 : vector<8x32xf32>
    %c0_36 = arith.constant 0 : index
    %c0_37 = arith.constant 0 : index
    %c0_38 = arith.constant 0 : index
    %82 = vector.load %arg8[%c0_36, %c0_37, %c0_38] : memref<1x8x32xf32, #tpu.memory_space<vmem>>, vector<1x8x32xf32>
    %83 = vector.shape_cast %82 : vector<1x8x32xf32> to vector<8x32xf32>
    %84 = vector.shape_cast %81 : vector<8x32xf32> to vector<1x8x32xf32>
    tpu.vector_store %arg8[%c0_36, %c0_37, %c0_38], %84 {strides = array<i32>} : memref<1x8x32xf32, #tpu.memory_space<vmem>>, vector<1x8x32xf32>,
    return
  }
  func.func @transform_0(%arg0: i32) -> (i32, i32, i32) {
    %c0_i32 = arith.constant 0 : i32
    %c0_i32_0 = arith.constant 0 : i32
    %c0_i32_1 = arith.constant 0 : i32
    return %arg0, %c0_i32, %c0_i32_0 : i32, i32, i32
  }
  func.func @transform_1(%arg0: i32) -> (i32, i32, i32) {
    %c0_i32 = arith.constant 0 : i32
    %c0_i32_0 = arith.constant 0 : i32
    %c0_i32_1 = arith.constant 0 : i32
    return %arg0, %c0_i32, %c0_i32_0 : i32, i32, i32
  }
  func.func @transform_2(%arg0: i32) -> (i32, i32, i32) {
    %c0_i32 = arith.constant 0 : i32
    %c0_i32_0 = arith.constant 0 : i32
    %c0_i32_1 = arith.constant 0 : i32
    return %arg0, %c0_i32, %c0_i32_0 : i32, i32, i32
  }
  func.func @transform_3(%arg0: i32) -> (i32, i32, i32) {
    %c0_i32 = arith.constant 0 : i32
    %c0_i32_0 = arith.constant 0 : i32
    %c0_i32_1 = arith.constant 0 : i32
    %c0_i32_2 = arith.constant 0 : i32
    return %c0_i32, %c0_i32_0, %c0_i32_1 : i32, i32, i32
  }
  func.func @transform_4(%arg0: i32) -> (i32, i32, i32) {
    %c0_i32 = arith.constant 0 : i32
    %c0_i32_0 = arith.constant 0 : i32
    %c0_i32_1 = arith.constant 0 : i32
    %c0_i32_2 = arith.constant 0 : i32
    return %c0_i32, %c0_i32_0, %c0_i32_1 : i32, i32, i32
  }
  func.func @transform_5(%arg0: i32) -> (i32, i32) {
    %c0_i32 = arith.constant 0 : i32
    %c0_i32_0 = arith.constant 0 : i32
    %c0_i32_1 = arith.constant 0 : i32
    return %c0_i32, %c0_i32_0 : i32, i32
  }
  func.func @transform_6(%arg0: i32) -> (i32, i32) {
    %c0_i32 = arith.constant 0 : i32
    %c0_i32_0 = arith.constant 0 : i32
    %c0_i32_1 = arith.constant 0 : i32
    return %c0_i32, %c0_i32_0 : i32, i32
  }
  func.func @transform_7(%arg0: i32) -> (i32, i32, i32) {
    %c0_i32 = arith.constant 0 : i32
    %c0_i32_0 = arith.constant 0 : i32
    %c0_i32_1 = arith.constant 0 : i32
    return %arg0, %c0_i32, %c0_i32_0 : i32, i32, i32
  }
}

</mosaic_0001>

<llo_original>
// kernel: tpu_custom_call.1
$region0: #{tpu_custom_call.1}
  #allocation0 [shape = 'u32[]', space=smem, size = 0x4, offset = 0x4, fixed_abs, tag = 'smem constant byte address 0x4 - core index']
  #allocation1 [shape = 'u32[72,128]{1,0:T(1,128)}', space=vmem, size = 0x9000, scoped, tag = 'internal scratch']
  %s0 = inlined_call_operand.hbm [shape: f32[2,8,32], index: 0, kind: input, shape index: {}]
  %s1 = inlined_call_operand.hbm [shape: f32[2,8,32], index: 1, kind: input, shape index: {}]
  %s2 = inlined_call_operand.hbm [shape: f32[2,8,32], index: 2, kind: input, shape index: {}]
  %s3 = inlined_call_operand.hbm [shape: f32[3,32,32], index: 3, kind: input, shape index: {}]
  %s4 = inlined_call_operand.vmem [shape: f32[3,1,32], index: 4, kind: input, shape index: {}]
  %s5 = inlined_call_operand.hbm [shape: f32[32,32], index: 5, kind: input, shape index: {}]
  %s6 = inlined_call_operand.vmem [shape: f32[1,32], index: 6, kind: input, shape index: {}]
  %s7 = inlined_call_operand.hbm [shape: f32[2,8,32], index: 7, kind: output, shape index: {}]
  %s8 = sld [smem:[#allocation0]]
  $region81: #{tpu_custom_call.1} parent=0
    _
  %s10 = ssub.s32 1, %s8
  %s11 = scalar_select 0, %s10, %s8
  $region1: #{tpu_custom_call.1} parent=0
    #allocation2 [shape = 'u8[8192]{0}', space=vmem, size = 0x2000, scoped, tag = 'input window, operand 0']
    #allocation3 [shape = 's32[2]{0}', space=sflag, size = 0x8, scoped, tag = 'scoped memory for tpu_custom_call.1']
    #allocation4 [shape = 's32[2]{0}', space=sflag, size = 0x8, scoped, tag = 'scoped memory for tpu_custom_call.1']
    #allocation5 [shape = 'u8[8192]{0}', space=vmem, size = 0x2000, scoped, tag = 'input window, operand 1']
    #allocation6 [shape = 's32[2]{0}', space=sflag, size = 0x8, scoped, tag = 'scoped memory for tpu_custom_call.1']
    #allocation7 [shape = 'u8[8192]{0}', space=vmem, size = 0x2000, scoped, tag = 'input window, operand 2']
    #allocation8 [shape = 'u8[49152]{0}', space=vmem, size = 0xc000, scoped, tag = 'input window, operand 3, single buffered']
    #allocation9 [shape = 's32[1]{0}', space=sflag, size = 0x4, scoped, tag = 'scoped memory for tpu_custom_call.1']
    #allocation10 [shape = 'u8[16384]{0}', space=vmem, size = 0x4000, scoped, tag = 'input window, operand 5, single buffered']
    #allocation11 [shape = 'u8[8192]{0}', space=vmem, size = 0x2000, scoped, tag = 'output window, operand 0']
    %12 = vsyncpa [#allocation3], 0
    %s13 = scalar_lea.sflag [#allocation3], 1
    %14 = vsyncpa %s13, 0
    %15 = vsyncpa [#allocation6], 0
    %s16 = scalar_lea.sflag [#allocation6], 1
    %17 = vsyncpa %s16, 0
    %18 = vsyncpa [#allocation9], 0
    %19 = vsyncpa [#allocation4], 0
    %s20 = scalar_lea.sflag [#allocation4], 1
    %21 = vsyncpa %s20, 0
    loop: start=0, step=1, limit=4
    $region2: #{tpu_custom_call.1} parent=1 // loop_pre_header
      _
    $region3: #{tpu_custom_call.1} parent=1 // loop_header
      %s23 = sphi 0, %s27
      %p24 = scmp.ge.s32.totalorder %s23, 4
      %s33 = sphi 0, %s35
      %s36 = sphi 0, %s33
      %s37 = sphi 0, %s36
      %s53 = sphi 0, %s37
      %s59 = sphi 0, %s61
      %s62 = sphi 0, %s59
      %s63 = sphi 0, %s62
      %s79 = sphi 0, %s63
      %s85 = sphi 0, %s87
      %s88 = sphi 0, %s85
      %s89 = sphi 0, %s88
      %s105 = sphi 0, %s89
      %s109 = sphi 0, %s109
      %s111 = sphi 0, %s109
      %s112 = sphi 0, %s111
      %s126 = sphi 0, %s112
      %s130 = sphi 0, %s130
      %s132 = sphi 0, %s130
      %s133 = sphi 0, %s132
      %s147 = sphi 0, %s133
      %s151 = sphi 0, %s151
      %s153 = sphi 0, %s151
      %s154 = sphi 0, %s153
      %s168 = sphi 0, %s154
      %s172 = sphi 0, %s172
      %s174 = sphi 0, %s172
      %s175 = sphi 0, %s174
      %s189 = sphi 0, %s175
      %s195 = sphi 0, %s197
      %s198 = sphi 0, %s195
      %s199 = sphi 0, %s198
      %s215 = sphi 0, %s199
    $region4: #{tpu_custom_call.1} parent=1 // loop_header_branch
      %26 = sbr.rel (%p24) target = $region8
    $region5: #{tpu_custom_call.1} parent=1 // loop_body
      %s28 = ssub.s32 %s23, 1
      %s29 = ssub.s32 %s23, 2
      %s30 = sadd.s32 %s23, 1
      %s31 = ssub.s32 %s23, %s30
      %p32 = scmp.eq.s32.totalorder %s31, 0
      %s34 = sadd.s32 %s33, 1
      %s35 = scalar_select %p32, %s33, %s34
      %p38 = pneg %p32
      %p39 = scmp.eq.s32.totalorder %s23, 1
      %p40 = por %p38, %p39
      %p41 = scmp.ne.s32.totalorder %s33, %s36
      %p42 = scmp.eq.s32.totalorder %s23, 0
      %p43 = por %p41, %p42
      %p44 = scmp.ne.s32.totalorder %s33, %s36
      %p45 = scmp.eq.s32.totalorder %s28, 1
      %p46 = por %p44, %p45
      %p47 = scmp.ne.s32.totalorder %s36, %s37
      %p48 = scmp.eq.s32.totalorder %s28, 0
      %p49 = por %p47, %p48
      %p50 = scmp.ne.s32.totalorder %s36, %s37
      %p51 = scmp.eq.s32.totalorder %s29, 1
      %p52 = por %p50, %p51
      %p54 = scmp.ne.s32.totalorder %s37, %s53
      %p55 = scmp.eq.s32.totalorder %s29, 0
      %p56 = por %p54, %p55
      %s57 = ssub.s32 %s23, %s30
      %p58 = scmp.eq.s32.totalorder %s57, 0
      %s60 = sadd.s32 %s59, 1
      %s61 = scalar_select %p58, %s59, %s60
      %p64 = pneg %p58
      %p65 = scmp.eq.s32.totalorder %s23, 1
      %p66 = por %p64, %p65
      %p67 = scmp.ne.s32.totalorder %s59, %s62
      %p68 = scmp.eq.s32.totalorder %s23, 0
      %p69 = por %p67, %p68
      %p70 = scmp.ne.s32.totalorder %s59, %s62
      %p71 = scmp.eq.s32.totalorder %s28, 1
      %p72 = por %p70, %p71
      %p73 = scmp.ne.s32.totalorder %s62, %s63
      %p74 = scmp.eq.s32.totalorder %s28, 0
      %p75 = por %p73, %p74
      %p76 = scmp.ne.s32.totalorder %s62, %s63
      %p77 = scmp.eq.s32.totalorder %s29, 1
      %p78 = por %p76, %p77
      %p80 = scmp.ne.s32.totalorder %s63, %s79
      %p81 = scmp.eq.s32.totalorder %s29, 0
      %p82 = por %p80, %p81
      %s83 = ssub.s32 %s23, %s30
      %p84 = scmp.eq.s32.totalorder %s83, 0
      %s86 = sadd.s32 %s85, 1
      %s87 = scalar_select %p84, %s85, %s86
      %p90 = pneg %p84
      %p91 = scmp.eq.s32.totalorder %s23, 1
      %p92 = por %p90, %p91
      %p93 = scmp.ne.s32.totalorder %s85, %s88
      %p94 = scmp.eq.s32.totalorder %s23, 0
      %p95 = por %p93, %p94
      %p96 = scmp.ne.s32.totalorder %s85, %s88
      %p97 = scmp.eq.s32.totalorder %s28, 1
      %p98 = por %p96, %p97
      %p99 = scmp.ne.s32.totalorder %s88, %s89
      %p100 = scmp.eq.s32.totalorder %s28, 0
      %p101 = por %p99, %p100
      %p102 = scmp.ne.s32.totalorder %s88, %s89
      %p103 = scmp.eq.s32.totalorder %s29, 1
      %p104 = por %p102, %p103
      %p106 = scmp.ne.s32.totalorder %s89, %s105
      %p107 = scmp.eq.s32.totalorder %s29, 0
      %p108 = por %p106, %p107
      %s110 = sadd.s32 %s109, 1
      %p113 = scmp.eq.s32.totalorder %s23, 1
      %p114 = scmp.ne.s32.totalorder %s109, %s111
      %p115 = scmp.eq.s32.totalorder %s23, 0
      %p116 = por %p114, %p115
      %p117 = scmp.ne.s32.totalorder %s109, %s111
      %p118 = scmp.eq.s32.totalorder %s28, 1
      %p119 = por %p117, %p118
      %p120 = scmp.ne.s32.totalorder %s111, %s112
      %p121 = scmp.eq.s32.totalorder %s28, 0
      %p122 = por %p120, %p121
      %p123 = scmp.ne.s32.totalorder %s111, %s112
      %p124 = scmp.eq.s32.totalorder %s29, 1
      %p125 = por %p123, %p124
      %p127 = scmp.ne.s32.totalorder %s112, %s126
      %p128 = scmp.eq.s32.totalorder %s29, 0
      %p129 = por %p127, %p128
      %s131 = sadd.s32 %s130, 1
      %p134 = scmp.eq.s32.totalorder %s23, 1
      %p135 = scmp.ne.s32.totalorder %s130, %s132
      %p136 = scmp.eq.s32.totalorder %s23, 0
      %p137 = por %p135, %p136
      %p138 = scmp.ne.s32.totalorder %s130, %s132
      %p139 = scmp.eq.s32.totalorder %s28, 1
      %p140 = por %p138, %p139
      %p141 = scmp.ne.s32.totalorder %s132, %s133
      %p142 = scmp.eq.s32.totalorder %s28, 0
      %p143 = por %p141, %p142
      %p144 = scmp.ne.s32.totalorder %s132, %s133
      %p145 = scmp.eq.s32.totalorder %s29, 1
      %p146 = por %p144, %p145
      %p148 = scmp.ne.s32.totalorder %s133, %s147
      %p149 = scmp.eq.s32.totalorder %s29, 0
      %p150 = por %p148, %p149
      %s152 = sadd.s32 %s151, 1
      %p155 = scmp.eq.s32.totalorder %s23, 1
      %p156 = scmp.ne.s32.totalorder %s151, %s153
      %p157 = scmp.eq.s32.totalorder %s23, 0
      %p158 = por %p156, %p157
      %p159 = scmp.ne.s32.totalorder %s151, %s153
      %p160 = scmp.eq.s32.totalorder %s28, 1
      %p161 = por %p159, %p160
      %p162 = scmp.ne.s32.totalorder %s153, %s154
      %p163 = scmp.eq.s32.totalorder %s28, 0
      %p164 = por %p162, %p163
      %p165 = scmp.ne.s32.totalorder %s153, %s154
      %p166 = scmp.eq.s32.totalorder %s29, 1
      %p167 = por %p165, %p166
      %p169 = scmp.ne.s32.totalorder %s154, %s168
      %p170 = scmp.eq.s32.totalorder %s29, 0
      %p171 = por %p169, %p170
      %s173 = sadd.s32 %s172, 1
      %p176 = scmp.eq.s32.totalorder %s23, 1
      %p177 = scmp.ne.s32.totalorder %s172, %s174
      %p178 = scmp.eq.s32.totalorder %s23, 0
      %p179 = por %p177, %p178
      %p180 = scmp.ne.s32.totalorder %s172, %s174
      %p181 = scmp.eq.s32.totalorder %s28, 1
      %p182 = por %p180, %p181
      %p183 = scmp.ne.s32.totalorder %s174, %s175
      %p184 = scmp.eq.s32.totalorder %s28, 0
      %p185 = por %p183, %p184
      %p186 = scmp.ne.s32.totalorder %s174, %s175
      %p187 = scmp.eq.s32.totalorder %s29, 1
      %p188 = por %p186, %p187
      %p190 = scmp.ne.s32.totalorder %s175, %s189
      %p191 = scmp.eq.s32.totalorder %s29, 0
      %p192 = por %p190, %p191
      %s193 = ssub.s32 %s23, %s30
      %p194 = scmp.eq.s32.totalorder %s193, 0
      %s196 = sadd.s32 %s195, 1
      %s197 = scalar_select %p194, %s195, %s196
      %p200 = pneg %p194
      %p201 = scmp.eq.s32.totalorder %s23, 1
      %p202 = por %p200, %p201
      %p203 = scmp.ne.s32.totalorder %s195, %s198
      %p204 = scmp.eq.s32.totalorder %s23, 0
      %p205 = por %p203, %p204
      %p206 = scmp.ne.s32.totalorder %s195, %s198
      %p207 = scmp.eq.s32.totalorder %s28, 1
      %p208 = por %p206, %p207
      %p209 = scmp.ne.s32.totalorder %s198, %s199
      %p210 = scmp.eq.s32.totalorder %s28, 0
      %p211 = por %p209, %p210
      %p212 = scmp.ne.s32.totalorder %s198, %s199
      %p213 = scmp.eq.s32.totalorder %s29, 1
      %p214 = por %p212, %p213
      %p216 = scmp.ne.s32.totalorder %s199, %s215
      %p217 = scmp.eq.s32.totalorder %s29, 0
      %p218 = por %p216, %p217
      %p219 = scmp.le.s32.totalorder 1, %s23
      %p220 = scmp.lt.s32.totalorder %s23, 3
      %p221 = pnand %p219, %p220
      %p222 = pneg %p221
      // Predicated region
      $region9: #{tpu_custom_call.1} parent=5 // pred_check
        _
      $region10: #{tpu_custom_call.1} parent=5 // pred_check_branch
        %224 = sbr.rel (%p221) target = $region12
      $region11: #{tpu_custom_call.1} parent=5 // pred_region
        %s225 = ssub.s32 %s23, 1
        // Predicated region
        $region13: #{tpu_custom_call.1} parent=11 // pred_check
          %p226 = pneg %p122
        $region14: #{tpu_custom_call.1} parent=11 // pred_check_branch
          %228 = sbr.rel (%p226) target = $region16
        $region15: #{tpu_custom_call.1} parent=11 // pred_region
          %230 = vsyncadd [#allocation9], 0
          %s231 = sshll.u32 %s3, 4
          %s232 = int_to_ptr.hbm [resolvable:$true] %s231
          %s233 = sshll.u32 [#allocation8], 4
          %s234 = int_to_ptr.vmem [resolvable:$true] %s233
          %239 = dma.hbm_to_vmem [thread:$0]  %s232, 1536, %s234, [#allocation9], 128, 128, 8
        $region16: #{tpu_custom_call.1} parent=11 // pred_fallthru
          _
        // Predicated region
        $region17: #{tpu_custom_call.1} parent=11 // pred_check
          %p240 = pneg %p143
        $region18: #{tpu_custom_call.1} parent=11 // pred_check_branch
          %242 = sbr.rel (%p240) target = $region20
        $region19: #{tpu_custom_call.1} parent=11 // pred_region
          _
        $region20: #{tpu_custom_call.1} parent=11 // pred_fallthru
          _
        // Predicated region
        $region21: #{tpu_custom_call.1} parent=11 // pred_check
          %p243 = pneg %p164
        $region22: #{tpu_custom_call.1} parent=11 // pred_check_branch
          %245 = sbr.rel (%p243) target = $region24
        $region23: #{tpu_custom_call.1} parent=11 // pred_region
          %247 = vsyncadd [#allocation9], 0
          %s248 = sshll.u32 %s5, 4
          %s249 = int_to_ptr.hbm [resolvable:$true] %s248
          %s250 = sshll.u32 [#allocation10], 4
          %s251 = int_to_ptr.vmem [resolvable:$true] %s250
          %256 = dma.hbm_to_vmem [thread:$0]  %s249, 512, %s251, [#allocation9], 128, 128, 8
        $region24: #{tpu_custom_call.1} parent=11 // pred_fallthru
          _
        // Predicated region
        $region25: #{tpu_custom_call.1} parent=11 // pred_check
          %p257 = pneg %p185
        $region26: #{tpu_custom_call.1} parent=11 // pred_check_branch
          %259 = sbr.rel (%p257) target = $region28
        $region27: #{tpu_custom_call.1} parent=11 // pred_region
          _
        $region28: #{tpu_custom_call.1} parent=11 // pred_fallthru
          _
      $region12: #{tpu_custom_call.1} parent=5 // pred_fallthru
        _
      %p260 = scmp.lt.s32.totalorder %s23, 2
      // Predicated region
      $region29: #{tpu_custom_call.1} parent=5 // pred_check
        %p261 = pneg %p260
      $region30: #{tpu_custom_call.1} parent=5 // pred_check_branch
        %263 = sbr.rel (%p261) target = $region32
      $region31: #{tpu_custom_call.1} parent=5 // pred_region
        // Predicated region
        $region33: #{tpu_custom_call.1} parent=31 // pred_check
          %p264 = pneg %p43
        $region34: #{tpu_custom_call.1} parent=31 // pred_check_branch
          %266 = sbr.rel (%p264) target = $region36
        $region35: #{tpu_custom_call.1} parent=31 // pred_region
          %s267 = sand.u32 %s33, 1
          %s268 = scalar_lea.sflag [#allocation3], %s267
          %s269 = sand.u32 %s33, 1
          %s270 = smul.addr %s269, 8
          %s271 = scalar_lea.vmem [#allocation2], %s270
          %273 = vsyncadd %s268, 0
          %s274 = smul.addr %s23, 8
          %s275 = scalar_lea.hbm %s0, %s274
          %s277 = sshll.u32 %s275, 4
          %s278 = int_to_ptr.hbm [resolvable:$true] %s277
          %s279 = sshll.u32 %s271, 4
          %s280 = int_to_ptr.vmem [resolvable:$true] %s279
          %282 = dma.hbm_to_vmem [thread:$0]  %s278, 128, %s280, %s268
        $region36: #{tpu_custom_call.1} parent=31 // pred_fallthru
          _
        // Predicated region
        $region37: #{tpu_custom_call.1} parent=31 // pred_check
          %p283 = pneg %p69
        $region38: #{tpu_custom_call.1} parent=31 // pred_check_branch
          %285 = sbr.rel (%p283) target = $region40
        $region39: #{tpu_custom_call.1} parent=31 // pred_region
          %s286 = sand.u32 %s23, 1
          %s287 = scalar_lea.sflag [#allocation6], %s286
          %s288 = sand.u32 %s59, 1
          %s289 = smul.addr %s288, 8
          %s290 = scalar_lea.vmem [#allocation5], %s289
          %292 = vsyncadd %s287, 0
          %s293 = smul.addr %s23, 8
          %s294 = scalar_lea.hbm %s1, %s293
          %s296 = sshll.u32 %s294, 4
          %s297 = int_to_ptr.hbm [resolvable:$true] %s296
          %s298 = sshll.u32 %s290, 4
          %s299 = int_to_ptr.vmem [resolvable:$true] %s298
          %301 = dma.hbm_to_vmem [thread:$0]  %s297, 128, %s299, %s287
        $region40: #{tpu_custom_call.1} parent=31 // pred_fallthru
          _
        // Predicated region
        $region41: #{tpu_custom_call.1} parent=31 // pred_check
          %p302 = pneg %p95
        $region42: #{tpu_custom_call.1} parent=31 // pred_check_branch
          %304 = sbr.rel (%p302) target = $region44
        $region43: #{tpu_custom_call.1} parent=31 // pred_region
          %s305 = sand.u32 %s23, 1
          %s306 = scalar_lea.sflag [#allocation6], %s305
          %s307 = sand.u32 %s85, 1
          %s308 = smul.addr %s307, 8
          %s309 = scalar_lea.vmem [#allocation7], %s308
          %311 = vsyncadd %s306, 0
          %s312 = smul.addr %s23, 8
          %s313 = scalar_lea.hbm %s2, %s312
          %s315 = sshll.u32 %s313, 4
          %s316 = int_to_ptr.hbm [resolvable:$true] %s315
          %s317 = sshll.u32 %s309, 4
          %s318 = int_to_ptr.vmem [resolvable:$true] %s317
          %320 = dma.hbm_to_vmem [thread:$0]  %s316, 128, %s318, %s306
        $region44: #{tpu_custom_call.1} parent=31 // pred_fallthru
          _
      $region32: #{tpu_custom_call.1} parent=5 // pred_fallthru
        _
      %p321 = scmp.le.s32.totalorder 1, %s23
      %p322 = scmp.lt.s32.totalorder %s23, 3
      %p323 = pnand %p321, %p322
      %p324 = pneg %p323
      // Predicated region
      $region45: #{tpu_custom_call.1} parent=5 // pred_check
        _
      $region46: #{tpu_custom_call.1} parent=5 // pred_check_branch
        %326 = sbr.rel (%p323) target = $region48
      $region47: #{tpu_custom_call.1} parent=5 // pred_region
        %s327 = ssub.s32 %s23, 1
        %s328 = sand.u32 %s36, 1
        %s329 = scalar_lea.sflag [#allocation3], %s328
        %s330 = sand.u32 %s36, 1
        %s331 = smul.addr %s330, 8
        %s332 = scalar_lea.vmem [#allocation2], %s331
        // Predicated region
        $region49: #{tpu_custom_call.1} parent=47 // pred_check
          %p333 = pneg %p49
        $region50: #{tpu_custom_call.1} parent=47 // pred_check_branch
          %335 = sbr.rel (%p333) target = $region52
        $region51: #{tpu_custom_call.1} parent=47 // pred_region
          %337 = dma.done %s329, 128
        $region52: #{tpu_custom_call.1} parent=47 // pred_fallthru
          _
        %s338 = sand.u32 %s28, 1
        %s339 = scalar_lea.sflag [#allocation6], %s338
        %s340 = sand.u32 %s62, 1
        %s341 = smul.addr %s340, 8
        %s342 = scalar_lea.vmem [#allocation5], %s341
        // Predicated region
        $region53: #{tpu_custom_call.1} parent=47 // pred_check
          %p343 = pneg %p75
        $region54: #{tpu_custom_call.1} parent=47 // pred_check_branch
          %345 = sbr.rel (%p343) target = $region56
        $region55: #{tpu_custom_call.1} parent=47 // pred_region
          %347 = dma.done %s339, 128
        $region56: #{tpu_custom_call.1} parent=47 // pred_fallthru
          _
        %s348 = sand.u32 %s28, 1
        %s349 = scalar_lea.sflag [#allocation6], %s348
        %s350 = sand.u32 %s88, 1
        %s351 = smul.addr %s350, 8
        %s352 = scalar_lea.vmem [#allocation7], %s351
        // Predicated region
        $region57: #{tpu_custom_call.1} parent=47 // pred_check
          %p353 = pneg %p101
        $region58: #{tpu_custom_call.1} parent=47 // pred_check_branch
          %355 = sbr.rel (%p353) target = $region60
        $region59: #{tpu_custom_call.1} parent=47 // pred_region
          %357 = dma.done %s349, 128
        $region60: #{tpu_custom_call.1} parent=47 // pred_fallthru
          _
        // Predicated region
        $region61: #{tpu_custom_call.1} parent=47 // pred_check
          %p358 = pneg %p122
        $region62: #{tpu_custom_call.1} parent=47 // pred_check_branch
          %360 = sbr.rel (%p358) target = $region64
        $region63: #{tpu_custom_call.1} parent=47 // pred_region
          %362 = dma.done [#allocation9], 1536
        $region64: #{tpu_custom_call.1} parent=47 // pred_fallthru
          _
        // Predicated region
        $region65: #{tpu_custom_call.1} parent=47 // pred_check
          %p363 = pneg %p164
        $region66: #{tpu_custom_call.1} parent=47 // pred_check_branch
          %365 = sbr.rel (%p363) target = $region68
        $region67: #{tpu_custom_call.1} parent=47 // pred_region
          %367 = dma.done [#allocation9], 512
        $region68: #{tpu_custom_call.1} parent=47 // pred_fallthru
          _
        %s368 = sand.u32 %s36, 1
        %s369 = scalar_lea.sflag [#allocation3], %s368
        %s370 = sand.u32 %s36, 1
        %s371 = smul.addr %s370, 8
        %s372 = scalar_lea.vmem [#allocation2], %s371
        %p373 = pneg %p49
        %p374 = pneg %p46
        %s375 = sand.u32 %s28, 1
        %s376 = scalar_lea.sflag [#allocation6], %s375
        %s377 = sand.u32 %s62, 1
        %s378 = smul.addr %s377, 8
        %s379 = scalar_lea.vmem [#allocation5], %s378
        %p380 = pneg %p75
        %p381 = pneg %p72
        %s382 = sand.u32 %s28, 1
        %s383 = scalar_lea.sflag [#allocation6], %s382
        %s384 = sand.u32 %s88, 1
        %s385 = smul.addr %s384, 8
        %s386 = scalar_lea.vmem [#allocation7], %s385
        %p387 = pneg %p101
        %p388 = pneg %p98
        %p389 = pneg %p122
        %p390 = pneg %p119
        %p391 = pneg %p143
        %p392 = pneg %p140
        %p393 = pneg %p164
        %p394 = pneg %p161
        %p395 = pneg %p185
        %p396 = pneg %p182
        %p397 = pneg %p211
        %p398 = pneg %p208
        %s399 = sand.u32 %s198, 1
        %s400 = scalar_lea.sflag [#allocation4], %s399
        %s401 = sand.u32 %s198, 1
        %s402 = smul.addr %s401, 8
        %s403 = scalar_lea.vmem [#allocation11], %s402
        %v404 = vld [vmem:[%s332] sm:$0xff]
        %v405 = vld [vmem:[#allocation8] sm:$0xff]
        %v406 = vld [vmem:[#allocation8 + $0x8] sm:$0xff]
        %v407 = vld [vmem:[#allocation8 + $0x10] sm:$0xff]
        %v408 = vld [vmem:[#allocation8 + $0x18] sm:$0xff]
        %v409 = vld [vmem:[%s4] sm:$0x1]
        %v411 = vperm.slane %v409, 0
        %vm413 = vcmask 261120
        %v415 = vsel %vm413, %v404, 0
        %417 = vmatpush.msra.mxu0 0.0
        %418 = vmatpush.msra.mxu0 0.0
        %419 = vmatpush.msra.mxu0 0.0
        %420 = vmatpush.msra.mxu0 0.0
        %421 = vmatpush.msra.mxu0 0.0
        %422 = vmatpush.msra.mxu0 0.0
        %423 = vmatpush.msra.mxu0 0.0
        %424 = vmatpush.msra.mxu0 0.0
        %425 = vmatpush.msra.mxu0 0.0
        %426 = vmatpush.msra.mxu0 0.0
        %427 = vmatpush.msra.mxu0 0.0
        %428 = vmatpush.msra.mxu0 0.0
        %429 = vmatpush.msra.mxu0 %v408
        %430 = vmatpush.msra.mxu0 %v407
        %431 = vmatpush.msra.mxu0 %v406
        %432 = vmatpush.msra.mxu0 %v405
        %433 = vmatmul.f32.gmra.mxu0 %v415
        %v434 = vpop.f32.mrf.mxu0
        %v435 = vadd.f32 %v411, %v434
        %436 = vdwg.mxu0
        %v437 = vmul.f32 %v435, 0.35355338
        %v438 = vld [vmem:[%s342] sm:$0xff]
        %s439 = scalar_lea.vmem [#allocation8], 32
        %v440 = vld [vmem:[%s439] sm:$0xff]
        %v441 = vld [vmem:[%s439 + $0x8] sm:$0xff]
        %v442 = vld [vmem:[%s439 + $0x10] sm:$0xff]
        %v443 = vld [vmem:[%s439 + $0x18] sm:$0xff]
        %s444 = scalar_lea.vmem %s4, 1
        %v445 = vld [vmem:[%s444] sm:$0x1]
        %v447 = vperm.slane %v445, 0
        %v450 = vsel %vm413, %v438, 0
        %452 = vmatpush.msra.mxu0 0.0
        %453 = vmatpush.msra.mxu0 0.0
        %454 = vmatpush.msra.mxu0 0.0
        %455 = vmatpush.msra.mxu0 0.0
        %456 = vmatpush.msra.mxu0 0.0
        %457 = vmatpush.msra.mxu0 0.0
        %458 = vmatpush.msra.mxu0 0.0
        %459 = vmatpush.msra.mxu0 0.0
        %460 = vmatpush.msra.mxu0 0.0
        %461 = vmatpush.msra.mxu0 0.0
        %462 = vmatpush.msra.mxu0 0.0
        %463 = vmatpush.msra.mxu0 0.0
        %464 = vmatpush.msra.mxu0 %v443
        %465 = vmatpush.msra.mxu0 %v442
        %466 = vmatpush.msra.mxu0 %v441
        %467 = vmatpush.msra.mxu0 %v440
        %468 = vmatmul.f32.gmra.mxu0 %v450
        %v469 = vpop.f32.mrf.mxu0
        %v470 = vadd.f32 %v447, %v469
        %471 = vdwg.mxu0
        %v472 = vld [vmem:[%s352] sm:$0xff]
        %s473 = scalar_lea.vmem [#allocation8], 64
        %v474 = vld [vmem:[%s473] sm:$0xff]
        %v475 = vld [vmem:[%s473 + $0x8] sm:$0xff]
        %v476 = vld [vmem:[%s473 + $0x10] sm:$0xff]
        %v477 = vld [vmem:[%s473 + $0x18] sm:$0xff]
        %s478 = scalar_lea.vmem %s4, 2
        %v479 = vld [vmem:[%s478] sm:$0x1]
        %v481 = vperm.slane %v479, 0
        %v484 = vsel %vm413, %v472, 0
        %486 = vmatpush.msra.mxu0 0.0
        %487 = vmatpush.msra.mxu0 0.0
        %488 = vmatpush.msra.mxu0 0.0
        %489 = vmatpush.msra.mxu0 0.0
        %490 = vmatpush.msra.mxu0 0.0
        %491 = vmatpush.msra.mxu0 0.0
        %492 = vmatpush.msra.mxu0 0.0
        %493 = vmatpush.msra.mxu0 0.0
        %494 = vmatpush.msra.mxu0 0.0
        %495 = vmatpush.msra.mxu0 0.0
        %496 = vmatpush.msra.mxu0 0.0
        %497 = vmatpush.msra.mxu0 0.0
        %498 = vmatpush.msra.mxu0 %v477
        %499 = vmatpush.msra.mxu0 %v476
        %500 = vmatpush.msra.mxu0 %v475
        %501 = vmatpush.msra.mxu0 %v474
        %502 = vmatmul.f32.gmra.mxu0 %v484
        %v503 = vpop.f32.mrf.mxu0
        %v504 = vadd.f32 %v481, %v503
        %505 = vdwg.mxu0
        %507 = vrot.lane.b32.xlu0 %v437, 120
        %v508 = vpop.permute.xlu0 %507
        %509 = vrot.lane.b32.xlu0 %v437, 112
        %v510 = vpop.permute.xlu0 %509
        %511 = vrot.lane.b32.xlu0 %v437, 104
        %v512 = vpop.permute.xlu0 %511
        %514 = vrot.lane.b32.xlu0 %v470, 120
        %v515 = vpop.permute.xlu0 %514
        %516 = vrot.lane.b32.xlu0 %v470, 112
        %v517 = vpop.permute.xlu0 %516
        %518 = vrot.lane.b32.xlu0 %v470, 104
        %v519 = vpop.permute.xlu0 %518
        %521 = vrot.lane.b32.xlu0 %v504, 120
        %v522 = vpop.permute.xlu0 %521
        %524 = vrot.lane.b32.xlu0 %v504, 112
        %v525 = vpop.permute.xlu0 %524
        %527 = vrot.lane.b32.xlu0 %v504, 104
        %v528 = vpop.permute.xlu0 %527
        %vm530 = vcmask 64512
        %v531 = vsel %vm530, %v437, 0
        %v533 = vsel %vm530, %v470, 0
        %535 = vmatpush.xpose.msra.mxu0 0.0
        %536 = vmatpush.xpose.msra.mxu0 0.0
        %537 = vmatpush.xpose.msra.mxu0 0.0
        %538 = vmatpush.xpose.msra.mxu0 0.0
        %539 = vmatpush.xpose.msra.mxu0 0.0
        %540 = vmatpush.xpose.msra.mxu0 0.0
        %541 = vmatpush.xpose.msra.mxu0 0.0
        %542 = vmatpush.xpose.msra.mxu0 0.0
        %543 = vmatpush.xpose.msra.mxu0 0.0
        %544 = vmatpush.xpose.msra.mxu0 0.0
        %545 = vmatpush.xpose.msra.mxu0 0.0
        %546 = vmatpush.xpose.msra.mxu0 0.0
        %547 = vmatpush.xpose.msra.mxu0 0.0
        %548 = vmatpush.xpose.msra.mxu0 0.0
        %549 = vmatpush.xpose.msra.mxu0 0.0
        %550 = vmatpush.xpose.msra.mxu0 %v533
        %551 = vmatmul.f32.gmra.mxu0 %v531
        %v552 = vpop.f32.mrf.mxu0
        %v553 = vadd.f32 0.0, %v552
        %554 = vdwg.mxu0
        %v555 = vsel %vm530, %v508, 0
        %v557 = vsel %vm530, %v515, 0
        %559 = vmatpush.xpose.msra.mxu0 0.0
        %560 = vmatpush.xpose.msra.mxu0 0.0
        %561 = vmatpush.xpose.msra.mxu0 0.0
        %562 = vmatpush.xpose.msra.mxu0 0.0
        %563 = vmatpush.xpose.msra.mxu0 0.0
        %564 = vmatpush.xpose.msra.mxu0 0.0
        %565 = vmatpush.xpose.msra.mxu0 0.0
        %566 = vmatpush.xpose.msra.mxu0 0.0
        %567 = vmatpush.xpose.msra.mxu0 0.0
        %568 = vmatpush.xpose.msra.mxu0 0.0
        %569 = vmatpush.xpose.msra.mxu0 0.0
        %570 = vmatpush.xpose.msra.mxu0 0.0
        %571 = vmatpush.xpose.msra.mxu0 0.0
        %572 = vmatpush.xpose.msra.mxu0 0.0
        %573 = vmatpush.xpose.msra.mxu0 0.0
        %574 = vmatpush.xpose.msra.mxu0 %v557
        %575 = vmatmul.f32.gmra.mxu0 %v555
        %v576 = vpop.f32.mrf.mxu0
        %v577 = vadd.f32 0.0, %v576
        %578 = vdwg.mxu0
        %v579 = vsel %vm530, %v510, 0
        %v581 = vsel %vm530, %v517, 0
        %583 = vmatpush.xpose.msra.mxu0 0.0
        %584 = vmatpush.xpose.msra.mxu0 0.0
        %585 = vmatpush.xpose.msra.mxu0 0.0
        %586 = vmatpush.xpose.msra.mxu0 0.0
        %587 = vmatpush.xpose.msra.mxu0 0.0
        %588 = vmatpush.xpose.msra.mxu0 0.0
        %589 = vmatpush.xpose.msra.mxu0 0.0
        %590 = vmatpush.xpose.msra.mxu0 0.0
        %591 = vmatpush.xpose.msra.mxu0 0.0
        %592 = vmatpush.xpose.msra.mxu0 0.0
        %593 = vmatpush.xpose.msra.mxu0 0.0
        %594 = vmatpush.xpose.msra.mxu0 0.0
        %595 = vmatpush.xpose.msra.mxu0 0.0
        %596 = vmatpush.xpose.msra.mxu0 0.0
        %597 = vmatpush.xpose.msra.mxu0 0.0
        %598 = vmatpush.xpose.msra.mxu0 %v581
        %599 = vmatmul.f32.gmra.mxu0 %v579
        %v600 = vpop.f32.mrf.mxu0
        %v601 = vadd.f32 0.0, %v600
        %602 = vdwg.mxu0
        %v603 = vsel %vm530, %v512, 0
        %v605 = vsel %vm530, %v519, 0
        %607 = vmatpush.xpose.msra.mxu0 0.0
        %608 = vmatpush.xpose.msra.mxu0 0.0
        %609 = vmatpush.xpose.msra.mxu0 0.0
        %610 = vmatpush.xpose.msra.mxu0 0.0
        %611 = vmatpush.xpose.msra.mxu0 0.0
        %612 = vmatpush.xpose.msra.mxu0 0.0
        %613 = vmatpush.xpose.msra.mxu0 0.0
        %614 = vmatpush.xpose.msra.mxu0 0.0
        %615 = vmatpush.xpose.msra.mxu0 0.0
        %616 = vmatpush.xpose.msra.mxu0 0.0
        %617 = vmatpush.xpose.msra.mxu0 0.0
        %618 = vmatpush.xpose.msra.mxu0 0.0
        %619 = vmatpush.xpose.msra.mxu0 0.0
        %620 = vmatpush.xpose.msra.mxu0 0.0
        %621 = vmatpush.xpose.msra.mxu0 0.0
        %622 = vmatpush.xpose.msra.mxu0 %v605
        %623 = vmatmul.f32.gmra.mxu0 %v603
        %v624 = vpop.f32.mrf.mxu0
        %v625 = vadd.f32 0.0, %v624
        %626 = vdwg.mxu0
        %v627 = vsel %vm530, %v553, -inf
        %628 = vmax.xlane.f32.xlu0 %v627
        %v629 = vpop.xlane.xlu0 %628
        %v630 = vsel %vm530, %v577, -inf
        %631 = vmax.xlane.f32.xlu0 %v630
        %v632 = vpop.xlane.xlu0 %631
        %v633 = vsel %vm530, %v601, -inf
        %634 = vmax.xlane.f32.xlu0 %v633
        %v635 = vpop.xlane.xlu0 %634
        %v636 = vsel %vm530, %v625, -inf
        %637 = vmax.xlane.f32.xlu0 %v636
        %v638 = vpop.xlane.xlu0 %637
        %v639 = vsub.f32 %v553, %v629
        %v640 = vsub.f32 %v577, %v632
        %v641 = vsub.f32 %v601, %v635
        %v642 = vsub.f32 %v625, %v638
        %v643 = vmul.f32 %v639, 1.442695
        %v644 = vpow.pop %v643
        %v645 = vmul.f32 %v640, 1.442695
        %v646 = vpow.pop %v645
        %v647 = vmul.f32 %v641, 1.442695
        %v648 = vpow.pop %v647
        %v649 = vmul.f32 %v642, 1.442695
        %v650 = vpow.pop %v649
        %v651 = vsel %vm530, %v644, 0.0
        %652 = vadd.xlane.f32.xlu0 %v651
        %v653 = vpop.xlane.xlu0 %652
        %v654 = vsel %vm530, %v646, 0.0
        %655 = vadd.xlane.f32.xlu0 %v654
        %v656 = vpop.xlane.xlu0 %655
        %v657 = vsel %vm530, %v648, 0.0
        %658 = vadd.xlane.f32.xlu0 %v657
        %v659 = vpop.xlane.xlu0 %658
        %v660 = vsel %vm530, %v650, 0.0
        %661 = vadd.xlane.f32.xlu0 %v660
        %v662 = vpop.xlane.xlu0 %661
        %v663 = vrcp.pop %v653
        %v664 = vrcp.pop %v656
        %v665 = vrcp.pop %v659
        %v666 = vrcp.pop %v662
        %v667 = vmul.f32 %v644, %v663
        %v668 = vmul.f32 %v646, %v664
        %v669 = vmul.f32 %v648, %v665
        %v670 = vmul.f32 %v650, %v666
        %v672 = vsel %vm530, %v667, 0
        %674 = vmatpush.msra.mxu0 0.0
        %675 = vmatpush.msra.mxu0 0.0
        %676 = vmatpush.msra.mxu0 0.0
        %677 = vmatpush.msra.mxu0 0.0
        %678 = vmatpush.msra.mxu0 0.0
        %679 = vmatpush.msra.mxu0 0.0
        %680 = vmatpush.msra.mxu0 0.0
        %681 = vmatpush.msra.mxu0 0.0
        %682 = vmatpush.msra.mxu0 0.0
        %683 = vmatpush.msra.mxu0 0.0
        %684 = vmatpush.msra.mxu0 0.0
        %685 = vmatpush.msra.mxu0 0.0
        %686 = vmatpush.msra.mxu0 0.0
        %687 = vmatpush.msra.mxu0 0.0
        %688 = vmatpush.msra.mxu0 0.0
        %689 = vmatpush.msra.mxu0 %v504
        %690 = vmatmul.f32.gmra.mxu0 %v672
        %v691 = vpop.f32.mrf.mxu0
        %v692 = vadd.f32 0.0, %v691
        %693 = vdwg.mxu0
        %v695 = vsel %vm530, %v668, 0
        %697 = vmatpush.msra.mxu0 0.0
        %698 = vmatpush.msra.mxu0 0.0
        %699 = vmatpush.msra.mxu0 0.0
        %700 = vmatpush.msra.mxu0 0.0
        %701 = vmatpush.msra.mxu0 0.0
        %702 = vmatpush.msra.mxu0 0.0
        %703 = vmatpush.msra.mxu0 0.0
        %704 = vmatpush.msra.mxu0 0.0
        %705 = vmatpush.msra.mxu0 0.0
        %706 = vmatpush.msra.mxu0 0.0
        %707 = vmatpush.msra.mxu0 0.0
        %708 = vmatpush.msra.mxu0 0.0
        %709 = vmatpush.msra.mxu0 0.0
        %710 = vmatpush.msra.mxu0 0.0
        %711 = vmatpush.msra.mxu0 0.0
        %712 = vmatpush.msra.mxu0 %v522
        %713 = vmatmul.f32.gmra.mxu0 %v695
        %v714 = vpop.f32.mrf.mxu0
        %v715 = vadd.f32 0.0, %v714
        %716 = vdwg.mxu0
        %v718 = vsel %vm530, %v669, 0
        %720 = vmatpush.msra.mxu0 0.0
        %721 = vmatpush.msra.mxu0 0.0
        %722 = vmatpush.msra.mxu0 0.0
        %723 = vmatpush.msra.mxu0 0.0
        %724 = vmatpush.msra.mxu0 0.0
        %725 = vmatpush.msra.mxu0 0.0
        %726 = vmatpush.msra.mxu0 0.0
        %727 = vmatpush.msra.mxu0 0.0
        %728 = vmatpush.msra.mxu0 0.0
        %729 = vmatpush.msra.mxu0 0.0
        %730 = vmatpush.msra.mxu0 0.0
        %731 = vmatpush.msra.mxu0 0.0
        %732 = vmatpush.msra.mxu0 0.0
        %733 = vmatpush.msra.mxu0 0.0
        %734 = vmatpush.msra.mxu0 0.0
        %735 = vmatpush.msra.mxu0 %v525
        %736 = vmatmul.f32.gmra.mxu0 %v718
        %v737 = vpop.f32.mrf.mxu0
        %v738 = vadd.f32 0.0, %v737
        %739 = vdwg.mxu0
        %v741 = vsel %vm530, %v670, 0
        %743 = vmatpush.msra.mxu0 0.0
        %744 = vmatpush.msra.mxu0 0.0
        %745 = vmatpush.msra.mxu0 0.0
        %746 = vmatpush.msra.mxu0 0.0
        %747 = vmatpush.msra.mxu0 0.0
        %748 = vmatpush.msra.mxu0 0.0
        %749 = vmatpush.msra.mxu0 0.0
        %750 = vmatpush.msra.mxu0 0.0
        %751 = vmatpush.msra.mxu0 0.0
        %752 = vmatpush.msra.mxu0 0.0
        %753 = vmatpush.msra.mxu0 0.0
        %754 = vmatpush.msra.mxu0 0.0
        %755 = vmatpush.msra.mxu0 0.0
        %756 = vmatpush.msra.mxu0 0.0
        %757 = vmatpush.msra.mxu0 0.0
        %758 = vmatpush.msra.mxu0 %v528
        %759 = vmatmul.f32.gmra.mxu0 %v741
        %v760 = vpop.f32.mrf.mxu0
        %v761 = vadd.f32 0.0, %v760
        %762 = vdwg.mxu0
        %764 = vrot.lane.b32.xlu0 %v715, 8
        %v765 = vpop.permute.xlu0 %764
        %768 = vrot.lane.b32.xlu0 %v738, 16
        %v769 = vpop.permute.xlu0 %768
        %772 = vrot.lane.b32.xlu0 %v761, 24
        %v773 = vpop.permute.xlu0 %772
        %v775 = vsel %vm530, %v692, %v765
        %vm776 = vcmask 130048
        %v777 = vsel %vm776, %v775, %v769
        %vm778 = vcmask 195584
        %v779 = vsel %vm778, %v777, %v773
        %v780 = vld [vmem:[#allocation10] sm:$0xff]
        %v781 = vld [vmem:[#allocation10 + $0x8] sm:$0xff]
        %v782 = vld [vmem:[#allocation10 + $0x10] sm:$0xff]
        %v783 = vld [vmem:[#allocation10 + $0x18] sm:$0xff]
        %v784 = vld [vmem:[%s6] sm:$0x1]
        %v786 = vperm.slane %v784, 0
        %v789 = vsel %vm413, %v779, 0
        %791 = vmatpush.msra.mxu0 0.0
        %792 = vmatpush.msra.mxu0 0.0
        %793 = vmatpush.msra.mxu0 0.0
        %794 = vmatpush.msra.mxu0 0.0
        %795 = vmatpush.msra.mxu0 0.0
        %796 = vmatpush.msra.mxu0 0.0
        %797 = vmatpush.msra.mxu0 0.0
        %798 = vmatpush.msra.mxu0 0.0
        %799 = vmatpush.msra.mxu0 0.0
        %800 = vmatpush.msra.mxu0 0.0
        %801 = vmatpush.msra.mxu0 0.0
        %802 = vmatpush.msra.mxu0 0.0
        %803 = vmatpush.msra.mxu0 %v783
        %804 = vmatpush.msra.mxu0 %v782
        %805 = vmatpush.msra.mxu0 %v781
        %806 = vmatpush.msra.mxu0 %v780
        %807 = vmatmul.f32.gmra.mxu0 %v789
        %v808 = vpop.f32.mrf.mxu0
        %v809 = vadd.f32 %v786, %v808
        %810 = vdwg.mxu0
        %811 = vst.msk [vmem:[%s403] sm:$0xff] %vm413, %v809
        %s812 = sand.u32 %s198, 1
        %s813 = scalar_lea.sflag [#allocation4], %s812
        %s814 = sand.u32 %s198, 1
        %s815 = smul.addr %s814, 8
        %s816 = scalar_lea.vmem [#allocation11], %s815
        // Predicated region
        $region69: #{tpu_custom_call.1} parent=47 // pred_check
          %p817 = pneg %p208
        $region70: #{tpu_custom_call.1} parent=47 // pred_check_branch
          %819 = sbr.rel (%p817) target = $region72
        $region71: #{tpu_custom_call.1} parent=47 // pred_region
          %821 = vsyncadd %s813, 0
          %s822 = smul.addr %s28, 8
          %s823 = scalar_lea.hbm %s7, %s822
          %s825 = sshll.u32 %s816, 4
          %s826 = int_to_ptr.vmem [resolvable:$true] %s825
          %s827 = sshll.u32 %s823, 4
          %s828 = int_to_ptr.hbm [resolvable:$true] %s827
          %830 = dma.vmem_to_hbm [thread:$0]  %s826, 128, %s828, %s813
        $region72: #{tpu_custom_call.1} parent=47 // pred_fallthru
          _
      $region48: #{tpu_custom_call.1} parent=5 // pred_fallthru
        _
      %p831 = scmp.le.s32.totalorder 2, %s23
      // Predicated region
      $region73: #{tpu_custom_call.1} parent=5 // pred_check
        %p832 = pneg %p831
      $region74: #{tpu_custom_call.1} parent=5 // pred_check_branch
        %834 = sbr.rel (%p832) target = $region76
      $region75: #{tpu_custom_call.1} parent=5 // pred_region
        %s835 = ssub.s32 %s23, 2
        // Predicated region
        $region77: #{tpu_custom_call.1} parent=75 // pred_check
          %p836 = pneg %p214
        $region78: #{tpu_custom_call.1} parent=75 // pred_check_branch
          %838 = sbr.rel (%p836) target = $region80
        $region79: #{tpu_custom_call.1} parent=75 // pred_region
          %s839 = sand.u32 %s199, 1
          %s840 = scalar_lea.sflag [#allocation4], %s839
          %s841 = sand.u32 %s199, 1
          %s842 = smul.addr %s841, 8
          %s843 = scalar_lea.vmem [#allocation11], %s842
          %845 = dma.done %s840, 128
        $region80: #{tpu_custom_call.1} parent=75 // pred_fallthru
          _
      $region76: #{tpu_custom_call.1} parent=5 // pred_fallthru
        _
    $region6: #{tpu_custom_call.1} parent=1 // loop_footer
      %s27 = sadd.s32 1, %s23
    $region7: #{tpu_custom_call.1} parent=1 // loop_footer_branch
      %22 = sbr.rel target = $region3
    $region8: #{tpu_custom_call.1} parent=1 // loop_exit
      _
    %846 = vsyncpa [#allocation3], 1
    %s847 = scalar_lea.sflag [#allocation3], 1
    %848 = vsyncpa %s847, 1
    %849 = vsyncpa [#allocation6], 1
    %s850 = scalar_lea.sflag [#allocation6], 1
    %851 = vsyncpa %s850, 1
    %852 = vsyncpa [#allocation9], 1
    %853 = vsyncpa [#allocation4], 1
    %s854 = scalar_lea.sflag [#allocation4], 1
    %855 = vsyncpa %s854, 1

// kernel: tpu_custom_call.1
$region0: #{tpu_custom_call.1}
  #allocation0 [shape = 'u32[]', space=smem, size = 0x4, offset = 0x4, fixed_abs, tag = 'smem constant byte address 0x4 - core index']
  #allocation1 [shape = 'u32[72,128]{1,0:T(1,128)}', space=vmem, size = 0x9000, scoped, tag = 'internal scratch']
  %s0 = inlined_call_operand.hbm [shape: f32[2,8,32], index: 0, kind: input, shape index: {}]
  %s1 = inlined_call_operand.hbm [shape: f32[2,8,32], index: 1, kind: input, shape index: {}]
  %s2 = inlined_call_operand.hbm [shape: f32[2,8,32], index: 2, kind: input, shape index: {}]
  %s3 = inlined_call_operand.hbm [shape: f32[3,32,32], index: 3, kind: input, shape index: {}]
  %s4 = inlined_call_operand.vmem [shape: f32[3,1,32], index: 4, kind: input, shape index: {}]
  %s5 = inlined_call_operand.hbm [shape: f32[32,32], index: 5, kind: input, shape index: {}]
  %s6 = inlined_call_operand.vmem [shape: f32[1,32], index: 6, kind: input, shape index: {}]
  %s7 = inlined_call_operand.hbm [shape: f32[2,8,32], index: 7, kind: output, shape index: {}]
  %s8 = sld [smem:[#allocation0]]
  $region81: #{tpu_custom_call.1} parent=0
    _
  %s10 = ssub.s32 1, %s8
  %s11 = scalar_select 0, %s10, %s8
  $region1: #{tpu_custom_call.1} parent=0
    #allocation2 [shape = 'u8[8192]{0}', space=vmem, size = 0x2000, scoped, tag = 'input window, operand 0']
    #allocation3 [shape = 's32[2]{0}', space=sflag, size = 0x8, scoped, tag = 'scoped memory for tpu_custom_call.1']
    #allocation4 [shape = 's32[2]{0}', space=sflag, size = 0x8, scoped, tag = 'scoped memory for tpu_custom_call.1']
    #allocation5 [shape = 'u8[8192]{0}', space=vmem, size = 0x2000, scoped, tag = 'input window, operand 1']
    #allocation6 [shape = 's32[2]{0}', space=sflag, size = 0x8, scoped, tag = 'scoped memory for tpu_custom_call.1']
    #allocation7 [shape = 'u8[8192]{0}', space=vmem, size = 0x2000, scoped, tag = 'input window, operand 2']
    #allocation8 [shape = 'u8[49152]{0}', space=vmem, size = 0xc000, scoped, tag = 'input window, operand 3, single buffered']
    #allocation9 [shape = 's32[1]{0}', space=sflag, size = 0x4, scoped, tag = 'scoped memory for tpu_custom_call.1']
    #allocation10 [shape = 'u8[16384]{0}', space=vmem, size = 0x4000, scoped, tag = 'input window, operand 5, single buffered']
    #allocation11 [shape = 'u8[8192]{0}', space=vmem, size = 0x2000, scoped, tag = 'output window, operand 0']
    %12 = vsyncpa [#allocation3], 0
    %s13 = scalar_lea.sflag [#allocation3], 1
    %14 = vsyncpa %s13, 0
    %15 = vsyncpa [#allocation6], 0
    %s16 = scalar_lea.sflag [#allocation6], 1
    %17 = vsyncpa %s16, 0
    %18 = vsyncpa [#allocation9], 0
    %19 = vsyncpa [#allocation4], 0
    %s20 = scalar_lea.sflag [#allocation4], 1
    %21 = vsyncpa %s20, 0
    loop: start=0, step=1, limit=4
    $region2: #{tpu_custom_call.1} parent=1 // loop_pre_header
      _
    $region3: #{tpu_custom_call.1} parent=1 // loop_header
      %s23 = sphi 0, %s27
      %p24 = scmp.ge.s32.totalorder %s23, 4
      %s33 = sphi 0, %s35
      %s36 = sphi 0, %s33
      %s37 = sphi 0, %s36
      %s53 = sphi 0, %s37
      %s59 = sphi 0, %s61
      %s62 = sphi 0, %s59
      %s63 = sphi 0, %s62
      %s79 = sphi 0, %s63
      %s85 = sphi 0, %s87
      %s88 = sphi 0, %s85
      %s89 = sphi 0, %s88
      %s105 = sphi 0, %s89
      %s109 = sphi 0, %s109
      %s111 = sphi 0, %s109
      %s112 = sphi 0, %s111
      %s126 = sphi 0, %s112
      %s130 = sphi 0, %s130
      %s132 = sphi 0, %s130
      %s133 = sphi 0, %s132
      %s147 = sphi 0, %s133
      %s151 = sphi 0, %s151
      %s153 = sphi 0, %s151
      %s154 = sphi 0, %s153
      %s168 = sphi 0, %s154
      %s172 = sphi 0, %s172
      %s174 = sphi 0, %s172
      %s175 = sphi 0, %s174
      %s189 = sphi 0, %s175
      %s195 = sphi 0, %s197
      %s198 = sphi 0, %s195
      %s199 = sphi 0, %s198
      %s215 = sphi 0, %s199
    $region4: #{tpu_custom_call.1} parent=1 // loop_header_branch
      %26 = sbr.rel (%p24) target = $region8
    $region5: #{tpu_custom_call.1} parent=1 // loop_body
      %s28 = ssub.s32 %s23, 1
      %s29 = ssub.s32 %s23, 2
      %s30 = sadd.s32 %s23, 1
      %s31 = ssub.s32 %s23, %s30
      %p32 = scmp.eq.s32.totalorder %s31, 0
      %s34 = sadd.s32 %s33, 1
      %s35 = scalar_select %p32, %s33, %s34
      %p38 = pneg %p32
      %p39 = scmp.eq.s32.totalorder %s23, 1
      %p40 = por %p38, %p39
      %p41 = scmp.ne.s32.totalorder %s33, %s36
      %p42 = scmp.eq.s32.totalorder %s23, 0
      %p43 = por %p41, %p42
      %p44 = scmp.ne.s32.totalorder %s33, %s36
      %p45 = scmp.eq.s32.totalorder %s28, 1
      %p46 = por %p44, %p45
      %p47 = scmp.ne.s32.totalorder %s36, %s37
      %p48 = scmp.eq.s32.totalorder %s28, 0
      %p49 = por %p47, %p48
      %p50 = scmp.ne.s32.totalorder %s36, %s37
      %p51 = scmp.eq.s32.totalorder %s29, 1
      %p52 = por %p50, %p51
      %p54 = scmp.ne.s32.totalorder %s37, %s53
      %p55 = scmp.eq.s32.totalorder %s29, 0
      %p56 = por %p54, %p55
      %s57 = ssub.s32 %s23, %s30
      %p58 = scmp.eq.s32.totalorder %s57, 0
      %s60 = sadd.s32 %s59, 1
      %s61 = scalar_select %p58, %s59, %s60
      %p64 = pneg %p58
      %p65 = scmp.eq.s32.totalorder %s23, 1
      %p66 = por %p64, %p65
      %p67 = scmp.ne.s32.totalorder %s59, %s62
      %p68 = scmp.eq.s32.totalorder %s23, 0
      %p69 = por %p67, %p68
      %p70 = scmp.ne.s32.totalorder %s59, %s62
      %p71 = scmp.eq.s32.totalorder %s28, 1
      %p72 = por %p70, %p71
      %p73 = scmp.ne.s32.totalorder %s62, %s63
      %p74 = scmp.eq.s32.totalorder %s28, 0
      %p75 = por %p73, %p74
      %p76 = scmp.ne.s32.totalorder %s62, %s63
      %p77 = scmp.eq.s32.totalorder %s29, 1
      %p78 = por %p76, %p77
      %p80 = scmp.ne.s32.totalorder %s63, %s79
      %p81 = scmp.eq.s32.totalorder %s29, 0
      %p82 = por %p80, %p81
      %s83 = ssub.s32 %s23, %s30
      %p84 = scmp.eq.s32.totalorder %s83, 0
      %s86 = sadd.s32 %s85, 1
      %s87 = scalar_select %p84, %s85, %s86
      %p90 = pneg %p84
      %p91 = scmp.eq.s32.totalorder %s23, 1
      %p92 = por %p90, %p91
      %p93 = scmp.ne.s32.totalorder %s85, %s88
      %p94 = scmp.eq.s32.totalorder %s23, 0
      %p95 = por %p93, %p94
      %p96 = scmp.ne.s32.totalorder %s85, %s88
      %p97 = scmp.eq.s32.totalorder %s28, 1
      %p98 = por %p96, %p97
      %p99 = scmp.ne.s32.totalorder %s88, %s89
      %p100 = scmp.eq.s32.totalorder %s28, 0
      %p101 = por %p99, %p100
      %p102 = scmp.ne.s32.totalorder %s88, %s89
      %p103 = scmp.eq.s32.totalorder %s29, 1
      %p104 = por %p102, %p103
      %p106 = scmp.ne.s32.totalorder %s89, %s105
      %p107 = scmp.eq.s32.totalorder %s29, 0
      %p108 = por %p106, %p107
      %s110 = sadd.s32 %s109, 1
      %p113 = scmp.eq.s32.totalorder %s23, 1
      %p114 = scmp.ne.s32.totalorder %s109, %s111
      %p115 = scmp.eq.s32.totalorder %s23, 0
      %p116 = por %p114, %p115
      %p117 = scmp.ne.s32.totalorder %s109, %s111
      %p118 = scmp.eq.s32.totalorder %s28, 1
      %p119 = por %p117, %p118
      %p120 = scmp.ne.s32.totalorder %s111, %s112
      %p121 = scmp.eq.s32.totalorder %s28, 0
      %p122 = por %p120, %p121
      %p123 = scmp.ne.s32.totalorder %s111, %s112
      %p124 = scmp.eq.s32.totalorder %s29, 1
      %p125 = por %p123, %p124
      %p127 = scmp.ne.s32.totalorder %s112, %s126
      %p128 = scmp.eq.s32.totalorder %s29, 0
      %p129 = por %p127, %p128
      %s131 = sadd.s32 %s130, 1
      %p134 = scmp.eq.s32.totalorder %s23, 1
      %p135 = scmp.ne.s32.totalorder %s130, %s132
      %p136 = scmp.eq.s32.totalorder %s23, 0
      %p137 = por %p135, %p136
      %p138 = scmp.ne.s32.totalorder %s130, %s132
      %p139 = scmp.eq.s32.totalorder %s28, 1
      %p140 = por %p138, %p139
      %p141 = scmp.ne.s32.totalorder %s132, %s133
      %p142 = scmp.eq.s32.totalorder %s28, 0
      %p143 = por %p141, %p142
      %p144 = scmp.ne.s32.totalorder %s132, %s133
      %p145 = scmp.eq.s32.totalorder %s29, 1
      %p146 = por %p144, %p145
      %p148 = scmp.ne.s32.totalorder %s133, %s147
      %p149 = scmp.eq.s32.totalorder %s29, 0
      %p150 = por %p148, %p149
      %s152 = sadd.s32 %s151, 1
      %p155 = scmp.eq.s32.totalorder %s23, 1
      %p156 = scmp.ne.s32.totalorder %s151, %s153
      %p157 = scmp.eq.s32.totalorder %s23, 0
      %p158 = por %p156, %p157
      %p159 = scmp.ne.s32.totalorder %s151, %s153
      %p160 = scmp.eq.s32.totalorder %s28, 1
      %p161 = por %p159, %p160
      %p162 = scmp.ne.s32.totalorder %s153, %s154
      %p163 = scmp.eq.s32.totalorder %s28, 0
      %p164 = por %p162, %p163
      %p165 = scmp.ne.s32.totalorder %s153, %s154
      %p166 = scmp.eq.s32.totalorder %s29, 1
      %p167 = por %p165, %p166
      %p169 = scmp.ne.s32.totalorder %s154, %s168
      %p170 = scmp.eq.s32.totalorder %s29, 0
      %p171 = por %p169, %p170
      %s173 = sadd.s32 %s172, 1
      %p176 = scmp.eq.s32.totalorder %s23, 1
      %p177 = scmp.ne.s32.totalorder %s172, %s174
      %p178 = scmp.eq.s32.totalorder %s23, 0
      %p179 = por %p177, %p178
      %p180 = scmp.ne.s32.totalorder %s172, %s174
      %p181 = scmp.eq.s32.totalorder %s28, 1
      %p182 = por %p180, %p181
      %p183 = scmp.ne.s32.totalorder %s174, %s175
      %p184 = scmp.eq.s32.totalorder %s28, 0
      %p185 = por %p183, %p184
      %p186 = scmp.ne.s32.totalorder %s174, %s175
      %p187 = scmp.eq.s32.totalorder %s29, 1
      %p188 = por %p186, %p187
      %p190 = scmp.ne.s32.totalorder %s175, %s189
      %p191 = scmp.eq.s32.totalorder %s29, 0
      %p192 = por %p190, %p191
      %s193 = ssub.s32 %s23, %s30
      %p194 = scmp.eq.s32.totalorder %s193, 0
      %s196 = sadd.s32 %s195, 1
      %s197 = scalar_select %p194, %s195, %s196
      %p200 = pneg %p194
      %p201 = scmp.eq.s32.totalorder %s23, 1
      %p202 = por %p200, %p201
      %p203 = scmp.ne.s32.totalorder %s195, %s198
      %p204 = scmp.eq.s32.totalorder %s23, 0
      %p205 = por %p203, %p204
      %p206 = scmp.ne.s32.totalorder %s195, %s198
      %p207 = scmp.eq.s32.totalorder %s28, 1
      %p208 = por %p206, %p207
      %p209 = scmp.ne.s32.totalorder %s198, %s199
      %p210 = scmp.eq.s32.totalorder %s28, 0
      %p211 = por %p209, %p210
      %p212 = scmp.ne.s32.totalorder %s198, %s199
      %p213 = scmp.eq.s32.totalorder %s29, 1
      %p214 = por %p212, %p213
      %p216 = scmp.ne.s32.totalorder %s199, %s215
      %p217 = scmp.eq.s32.totalorder %s29, 0
      %p218 = por %p216, %p217
      %p219 = scmp.le.s32.totalorder 1, %s23
      %p220 = scmp.lt.s32.totalorder %s23, 3
      %p221 = pnand %p219, %p220
      %p222 = pneg %p221
      // Predicated region
      $region9: #{tpu_custom_call.1} parent=5 // pred_check
        _
      $region10: #{tpu_custom_call.1} parent=5 // pred_check_branch
        %224 = sbr.rel (%p221) target = $region12
      $region11: #{tpu_custom_call.1} parent=5 // pred_region
        %s225 = ssub.s32 %s23, 1
        // Predicated region
        $region13: #{tpu_custom_call.1} parent=11 // pred_check
          %p226 = pneg %p122
        $region14: #{tpu_custom_call.1} parent=11 // pred_check_branch
          %228 = sbr.rel (%p226) target = $region16
        $region15: #{tpu_custom_call.1} parent=11 // pred_region
          %230 = vsyncadd [#allocation9], 0
          %s231 = sshll.u32 %s3, 4
          %s232 = int_to_ptr.hbm [resolvable:$true] %s231
          %s233 = sshll.u32 [#allocation8], 4
          %s234 = int_to_ptr.vmem [resolvable:$true] %s233
          %239 = dma.hbm_to_vmem [thread:$0]  %s232, 1536, %s234, [#allocation9], 128, 128, 8
        $region16: #{tpu_custom_call.1} parent=11 // pred_fallthru
          _
        // Predicated region
        $region17: #{tpu_custom_call.1} parent=11 // pred_check
          %p240 = pneg %p143
        $region18: #{tpu_custom_call.1} parent=11 // pred_check_branch
          %242 = sbr.rel (%p240) target = $region20
        $region19: #{tpu_custom_call.1} parent=11 // pred_region
          _
        $region20: #{tpu_custom_call.1} parent=11 // pred_fallthru
          _
        // Predicated region
        $region21: #{tpu_custom_call.1} parent=11 // pred_check
          %p243 = pneg %p164
        $region22: #{tpu_custom_call.1} parent=11 // pred_check_branch
          %245 = sbr.rel (%p243) target = $region24
        $region23: #{tpu_custom_call.1} parent=11 // pred_region
          %247 = vsyncadd [#allocation9], 0
          %s248 = sshll.u32 %s5, 4
          %s249 = int_to_ptr.hbm [resolvable:$true] %s248
          %s250 = sshll.u32 [#allocation10], 4
          %s251 = int_to_ptr.vmem [resolvable:$true] %s250
          %256 = dma.hbm_to_vmem [thread:$0]  %s249, 512, %s251, [#allocation9], 128, 128, 8
        $region24: #{tpu_custom_call.1} parent=11 // pred_fallthru
          _
        // Predicated region
        $region25: #{tpu_custom_call.1} parent=11 // pred_check
          %p257 = pneg %p185
        $region26: #{tpu_custom_call.1} parent=11 // pred_check_branch
          %259 = sbr.rel (%p257) target = $region28
        $region27: #{tpu_custom_call.1} parent=11 // pred_region
          _
        $region28: #{tpu_custom_call.1} parent=11 // pred_fallthru
          _
      $region12: #{tpu_custom_call.1} parent=5 // pred_fallthru
        _
      %p260 = scmp.lt.s32.totalorder %s23, 2
      // Predicated region
      $region29: #{tpu_custom_call.1} parent=5 // pred_check
        %p261 = pneg %p260
      $region30: #{tpu_custom_call.1} parent=5 // pred_check_branch
        %263 = sbr.rel (%p261) target = $region32
      $region31: #{tpu_custom_call.1} parent=5 // pred_region
        // Predicated region
        $region33: #{tpu_custom_call.1} parent=31 // pred_check
          %p264 = pneg %p43
        $region34: #{tpu_custom_call.1} parent=31 // pred_check_branch
          %266 = sbr.rel (%p264) target = $region36
        $region35: #{tpu_custom_call.1} parent=31 // pred_region
          %s267 = sand.u32 %s33, 1
          %s268 = scalar_lea.sflag [#allocation3], %s267
          %s269 = sand.u32 %s33, 1
          %s270 = smul.addr %s269, 8
          %s271 = scalar_lea.vmem [#allocation2], %s270
          %273 = vsyncadd %s268, 0
          %s274 = smul.addr %s23, 8
          %s275 = scalar_lea.hbm %s0, %s274
          %s277 = sshll.u32 %s275, 4
          %s278 = int_to_ptr.hbm [resolvable:$true] %s277
          %s279 = sshll.u32 %s271, 4
          %s280 = int_to_ptr.vmem [resolvable:$true] %s279
          %282 = dma.hbm_to_vmem [thread:$0]  %s278, 128, %s280, %s268
        $region36: #{tpu_custom_call.1} parent=31 // pred_fallthru
          _
        // Predicated region
        $region37: #{tpu_custom_call.1} parent=31 // pred_check
          %p283 = pneg %p69
        $region38: #{tpu_custom_call.1} parent=31 // pred_check_branch
          %285 = sbr.rel (%p283) target = $region40
        $region39: #{tpu_custom_call.1} parent=31 // pred_region
          %s286 = sand.u32 %s23, 1
          %s287 = scalar_lea.sflag [#allocation6], %s286
          %s288 = sand.u32 %s59, 1
          %s289 = smul.addr %s288, 8
          %s290 = scalar_lea.vmem [#allocation5], %s289
          %292 = vsyncadd %s287, 0
          %s293 = smul.addr %s23, 8
          %s294 = scalar_lea.hbm %s1, %s293
          %s296 = sshll.u32 %s294, 4
          %s297 = int_to_ptr.hbm [resolvable:$true] %s296
          %s298 = sshll.u32 %s290, 4
          %s299 = int_to_ptr.vmem [resolvable:$true] %s298
          %301 = dma.hbm_to_vmem [thread:$0]  %s297, 128, %s299, %s287
        $region40: #{tpu_custom_call.1} parent=31 // pred_fallthru
          _
        // Predicated region
        $region41: #{tpu_custom_call.1} parent=31 // pred_check
          %p302 = pneg %p95
        $region42: #{tpu_custom_call.1} parent=31 // pred_check_branch
          %304 = sbr.rel (%p302) target = $region44
        $region43: #{tpu_custom_call.1} parent=31 // pred_region
          %s305 = sand.u32 %s23, 1
          %s306 = scalar_lea.sflag [#allocation6], %s305
          %s307 = sand.u32 %s85, 1
          %s308 = smul.addr %s307, 8
          %s309 = scalar_lea.vmem [#allocation7], %s308
          %311 = vsyncadd %s306, 0
          %s312 = smul.addr %s23, 8
          %s313 = scalar_lea.hbm %s2, %s312
          %s315 = sshll.u32 %s313, 4
          %s316 = int_to_ptr.hbm [resolvable:$true] %s315
          %s317 = sshll.u32 %s309, 4
          %s318 = int_to_ptr.vmem [resolvable:$true] %s317
          %320 = dma.hbm_to_vmem [thread:$0]  %s316, 128, %s318, %s306
        $region44: #{tpu_custom_call.1} parent=31 // pred_fallthru
          _
      $region32: #{tpu_custom_call.1} parent=5 // pred_fallthru
        _
      %p321 = scmp.le.s32.totalorder 1, %s23
      %p322 = scmp.lt.s32.totalorder %s23, 3
      %p323 = pnand %p321, %p322
      %p324 = pneg %p323
      // Predicated region
      $region45: #{tpu_custom_call.1} parent=5 // pred_check
        _
      $region46: #{tpu_custom_call.1} parent=5 // pred_check_branch
        %326 = sbr.rel (%p323) target = $region48
      $region47: #{tpu_custom_call.1} parent=5 // pred_region
        %s327 = ssub.s32 %s23, 1
        %s328 = sand.u32 %s36, 1
        %s329 = scalar_lea.sflag [#allocation3], %s328
        %s330 = sand.u32 %s36, 1
        %s331 = smul.addr %s330, 8
        %s332 = scalar_lea.vmem [#allocation2], %s331
        // Predicated region
        $region49: #{tpu_custom_call.1} parent=47 // pred_check
          %p333 = pneg %p49
        $region50: #{tpu_custom_call.1} parent=47 // pred_check_branch
          %335 = sbr.rel (%p333) target = $region52
        $region51: #{tpu_custom_call.1} parent=47 // pred_region
          %337 = dma.done %s329, 128
        $region52: #{tpu_custom_call.1} parent=47 // pred_fallthru
          _
        %s338 = sand.u32 %s28, 1
        %s339 = scalar_lea.sflag [#allocation6], %s338
        %s340 = sand.u32 %s62, 1
        %s341 = smul.addr %s340, 8
        %s342 = scalar_lea.vmem [#allocation5], %s341
        // Predicated region
        $region53: #{tpu_custom_call.1} parent=47 // pred_check
          %p343 = pneg %p75
        $region54: #{tpu_custom_call.1} parent=47 // pred_check_branch
          %345 = sbr.rel (%p343) target = $region56
        $region55: #{tpu_custom_call.1} parent=47 // pred_region
          %347 = dma.done %s339, 128
        $region56: #{tpu_custom_call.1} parent=47 // pred_fallthru
          _
        %s348 = sand.u32 %s28, 1
        %s349 = scalar_lea.sflag [#allocation6], %s348
        %s350 = sand.u32 %s88, 1
        %s351 = smul.addr %s350, 8
        %s352 = scalar_lea.vmem [#allocation7], %s351
        // Predicated region
        $region57: #{tpu_custom_call.1} parent=47 // pred_check
          %p353 = pneg %p101
        $region58: #{tpu_custom_call.1} parent=47 // pred_check_branch
          %355 = sbr.rel (%p353) target = $region60
        $region59: #{tpu_custom_call.1} parent=47 // pred_region
          %357 = dma.done %s349, 128
        $region60: #{tpu_custom_call.1} parent=47 // pred_fallthru
          _
        // Predicated region
        $region61: #{tpu_custom_call.1} parent=47 // pred_check
          %p358 = pneg %p122
        $region62: #{tpu_custom_call.1} parent=47 // pred_check_branch
          %360 = sbr.rel (%p358) target = $region64
        $region63: #{tpu_custom_call.1} parent=47 // pred_region
          %362 = dma.done [#allocation9], 1536
        $region64: #{tpu_custom_call.1} parent=47 // pred_fallthru
          _
        // Predicated region
        $region65: #{tpu_custom_call.1} parent=47 // pred_check
          %p363 = pneg %p164
        $region66: #{tpu_custom_call.1} parent=47 // pred_check_branch
          %365 = sbr.rel (%p363) target = $region68
        $region67: #{tpu_custom_call.1} parent=47 // pred_region
          %367 = dma.done [#allocation9], 512
        $region68: #{tpu_custom_call.1} parent=47 // pred_fallthru
          _
        %s368 = sand.u32 %s36, 1
        %s369 = scalar_lea.sflag [#allocation3], %s368
        %s370 = sand.u32 %s36, 1
        %s371 = smul.addr %s370, 8
        %s372 = scalar_lea.vmem [#allocation2], %s371
        %p373 = pneg %p49
        %p374 = pneg %p46
        %s375 = sand.u32 %s28, 1
        %s376 = scalar_lea.sflag [#allocation6], %s375
        %s377 = sand.u32 %s62, 1
        %s378 = smul.addr %s377, 8
        %s379 = scalar_lea.vmem [#allocation5], %s378
        %p380 = pneg %p75
        %p381 = pneg %p72
        %s382 = sand.u32 %s28, 1
        %s383 = scalar_lea.sflag [#allocation6], %s382
        %s384 = sand.u32 %s88, 1
        %s385 = smul.addr %s384, 8
        %s386 = scalar_lea.vmem [#allocation7], %s385
        %p387 = pneg %p101
        %p388 = pneg %p98
        %p389 = pneg %p122
        %p390 = pneg %p119
        %p391 = pneg %p143
        %p392 = pneg %p140
        %p393 = pneg %p164
        %p394 = pneg %p161
        %p395 = pneg %p185
        %p396 = pneg %p182
        %p397 = pneg %p211
        %p398 = pneg %p208
        %s399 = sand.u32 %s198, 1
        %s400 = scalar_lea.sflag [#allocation4], %s399
        %s401 = sand.u32 %s198, 1
        %s402 = smul.addr %s401, 8
        %s403 = scalar_lea.vmem [#allocation11], %s402
        %v404 = vld [vmem:[%s332] sm:$0xff]
        %v405 = vld [vmem:[#allocation8] sm:$0xff]
        %v406 = vld [vmem:[#allocation8 + $0x8] sm:$0xff]
        %v407 = vld [vmem:[#allocation8 + $0x10] sm:$0xff]
        %v408 = vld [vmem:[#allocation8 + $0x18] sm:$0xff]
        %v409 = vld [vmem:[%s4] sm:$0x1]
        %v411 = vperm.slane %v409, 0
        %vm413 = vcmask 261120
        %v415 = vsel %vm413, %v404, 0
        %417 = vmatpush.msra.mxu0 0.0
        %418 = vmatpush.msra.mxu0 0.0
        %419 = vmatpush.msra.mxu0 0.0
        %420 = vmatpush.msra.mxu0 0.0
        %421 = vmatpush.msra.mxu0 0.0
        %422 = vmatpush.msra.mxu0 0.0
        %423 = vmatpush.msra.mxu0 0.0
        %424 = vmatpush.msra.mxu0 0.0
        %425 = vmatpush.msra.mxu0 0.0
        %426 = vmatpush.msra.mxu0 0.0
        %427 = vmatpush.msra.mxu0 0.0
        %428 = vmatpush.msra.mxu0 0.0
        %429 = vmatpush.msra.mxu0 %v408
        %430 = vmatpush.msra.mxu0 %v407
        %431 = vmatpush.msra.mxu0 %v406
        %432 = vmatpush.msra.mxu0 %v405
        %433 = vmatmul.f32.gmra.mxu0 %v415
        %v434 = vpop.f32.mrf.mxu0
        %v435 = vadd.f32 %v411, %v434
        %436 = vdwg.mxu0
        %v437 = vmul.f32 %v435, 0.35355338
        %v438 = vld [vmem:[%s342] sm:$0xff]
        %s439 = scalar_lea.vmem [#allocation8], 32
        %v440 = vld [vmem:[%s439] sm:$0xff]
        %v441 = vld [vmem:[%s439 + $0x8] sm:$0xff]
        %v442 = vld [vmem:[%s439 + $0x10] sm:$0xff]
        %v443 = vld [vmem:[%s439 + $0x18] sm:$0xff]
        %s444 = scalar_lea.vmem %s4, 1
        %v445 = vld [vmem:[%s444] sm:$0x1]
        %v447 = vperm.slane %v445, 0
        %v450 = vsel %vm413, %v438, 0
        %452 = vmatpush.msra.mxu0 0.0
        %453 = vmatpush.msra.mxu0 0.0
        %454 = vmatpush.msra.mxu0 0.0
        %455 = vmatpush.msra.mxu0 0.0
        %456 = vmatpush.msra.mxu0 0.0
        %457 = vmatpush.msra.mxu0 0.0
        %458 = vmatpush.msra.mxu0 0.0
        %459 = vmatpush.msra.mxu0 0.0
        %460 = vmatpush.msra.mxu0 0.0
        %461 = vmatpush.msra.mxu0 0.0
        %462 = vmatpush.msra.mxu0 0.0
        %463 = vmatpush.msra.mxu0 0.0
        %464 = vmatpush.msra.mxu0 %v443
        %465 = vmatpush.msra.mxu0 %v442
        %466 = vmatpush.msra.mxu0 %v441
        %467 = vmatpush.msra.mxu0 %v440
        %468 = vmatmul.f32.gmra.mxu0 %v450
        %v469 = vpop.f32.mrf.mxu0
        %v470 = vadd.f32 %v447, %v469
        %471 = vdwg.mxu0
        %v472 = vld [vmem:[%s352] sm:$0xff]
        %s473 = scalar_lea.vmem [#allocation8], 64
        %v474 = vld [vmem:[%s473] sm:$0xff]
        %v475 = vld [vmem:[%s473 + $0x8] sm:$0xff]
        %v476 = vld [vmem:[%s473 + $0x10] sm:$0xff]
        %v477 = vld [vmem:[%s473 + $0x18] sm:$0xff]
        %s478 = scalar_lea.vmem %s4, 2
        %v479 = vld [vmem:[%s478] sm:$0x1]
        %v481 = vperm.slane %v479, 0
        %v484 = vsel %vm413, %v472, 0
        %486 = vmatpush.msra.mxu0 0.0
        %487 = vmatpush.msra.mxu0 0.0
        %488 = vmatpush.msra.mxu0 0.0
        %489 = vmatpush.msra.mxu0 0.0
        %490 = vmatpush.msra.mxu0 0.0
        %491 = vmatpush.msra.mxu0 0.0
        %492 = vmatpush.msra.mxu0 0.0
        %493 = vmatpush.msra.mxu0 0.0
        %494 = vmatpush.msra.mxu0 0.0
        %495 = vmatpush.msra.mxu0 0.0
        %496 = vmatpush.msra.mxu0 0.0
        %497 = vmatpush.msra.mxu0 0.0
        %498 = vmatpush.msra.mxu0 %v477
        %499 = vmatpush.msra.mxu0 %v476
        %500 = vmatpush.msra.mxu0 %v475
        %501 = vmatpush.msra.mxu0 %v474
        %502 = vmatmul.f32.gmra.mxu0 %v484
        %v503 = vpop.f32.mrf.mxu0
        %v504 = vadd.f32 %v481, %v503
        %505 = vdwg.mxu0
        %507 = vrot.lane.b32.xlu0 %v437, 120
        %v508 = vpop.permute.xlu0 %507
        %509 = vrot.lane.b32.xlu0 %v437, 112
        %v510 = vpop.permute.xlu0 %509
        %511 = vrot.lane.b32.xlu0 %v437, 104
        %v512 = vpop.permute.xlu0 %511
        %514 = vrot.lane.b32.xlu0 %v470, 120
        %v515 = vpop.permute.xlu0 %514
        %516 = vrot.lane.b32.xlu0 %v470, 112
        %v517 = vpop.permute.xlu0 %516
        %518 = vrot.lane.b32.xlu0 %v470, 104
        %v519 = vpop.permute.xlu0 %518
        %521 = vrot.lane.b32.xlu0 %v504, 120
        %v522 = vpop.permute.xlu0 %521
        %524 = vrot.lane.b32.xlu0 %v504, 112
        %v525 = vpop.permute.xlu0 %524
        %527 = vrot.lane.b32.xlu0 %v504, 104
        %v528 = vpop.permute.xlu0 %527
        %vm530 = vcmask 64512
        %v531 = vsel %vm530, %v437, 0
        %v533 = vsel %vm530, %v470, 0
        %535 = vmatpush.xpose.msra.mxu0 0.0
        %536 = vmatpush.xpose.msra.mxu0 0.0
        %537 = vmatpush.xpose.msra.mxu0 0.0
        %538 = vmatpush.xpose.msra.mxu0 0.0
        %539 = vmatpush.xpose.msra.mxu0 0.0
        %540 = vmatpush.xpose.msra.mxu0 0.0
        %541 = vmatpush.xpose.msra.mxu0 0.0
        %542 = vmatpush.xpose.msra.mxu0 0.0
        %543 = vmatpush.xpose.msra.mxu0 0.0
        %544 = vmatpush.xpose.msra.mxu0 0.0
        %545 = vmatpush.xpose.msra.mxu0 0.0
        %546 = vmatpush.xpose.msra.mxu0 0.0
        %547 = vmatpush.xpose.msra.mxu0 0.0
        %548 = vmatpush.xpose.msra.mxu0 0.0
        %549 = vmatpush.xpose.msra.mxu0 0.0
        %550 = vmatpush.xpose.msra.mxu0 %v533
        %551 = vmatmul.f32.gmra.mxu0 %v531
        %v552 = vpop.f32.mrf.mxu0
        %v553 = vadd.f32 0.0, %v552
        %554 = vdwg.mxu0
        %v555 = vsel %vm530, %v508, 0
        %v557 = vsel %vm530, %v515, 0
        %559 = vmatpush.xpose.msra.mxu0 0.0
        %560 = vmatpush.xpose.msra.mxu0 0.0
        %561 = vmatpush.xpose.msra.mxu0 0.0
        %562 = vmatpush.xpose.msra.mxu0 0.0
        %563 = vmatpush.xpose.msra.mxu0 0.0
        %564 = vmatpush.xpose.msra.mxu0 0.0
        %565 = vmatpush.xpose.msra.mxu0 0.0
        %566 = vmatpush.xpose.msra.mxu0 0.0
        %567 = vmatpush.xpose.msra.mxu0 0.0
        %568 = vmatpush.xpose.msra.mxu0 0.0
        %569 = vmatpush.xpose.msra.mxu0 0.0
        %570 = vmatpush.xpose.msra.mxu0 0.0
        %571 = vmatpush.xpose.msra.mxu0 0.0
        %572 = vmatpush.xpose.msra.mxu0 0.0
        %573 = vmatpush.xpose.msra.mxu0 0.0
        %574 = vmatpush.xpose.msra.mxu0 %v557
        %575 = vmatmul.f32.gmra.mxu0 %v555
        %v576 = vpop.f32.mrf.mxu0
        %v577 = vadd.f32 0.0, %v576
        %578 = vdwg.mxu0
        %v579 = vsel %vm530, %v510, 0
        %v581 = vsel %vm530, %v517, 0
        %583 = vmatpush.xpose.msra.mxu0 0.0
        %584 = vmatpush.xpose.msra.mxu0 0.0
        %585 = vmatpush.xpose.msra.mxu0 0.0
        %586 = vmatpush.xpose.msra.mxu0 0.0
        %587 = vmatpush.xpose.msra.mxu0 0.0
        %588 = vmatpush.xpose.msra.mxu0 0.0
        %589 = vmatpush.xpose.msra.mxu0 0.0
        %590 = vmatpush.xpose.msra.mxu0 0.0
        %591 = vmatpush.xpose.msra.mxu0 0.0
        %592 = vmatpush.xpose.msra.mxu0 0.0
        %593 = vmatpush.xpose.msra.mxu0 0.0
        %594 = vmatpush.xpose.msra.mxu0 0.0
        %595 = vmatpush.xpose.msra.mxu0 0.0
        %596 = vmatpush.xpose.msra.mxu0 0.0
        %597 = vmatpush.xpose.msra.mxu0 0.0
        %598 = vmatpush.xpose.msra.mxu0 %v581
        %599 = vmatmul.f32.gmra.mxu0 %v579
        %v600 = vpop.f32.mrf.mxu0
        %v601 = vadd.f32 0.0, %v600
        %602 = vdwg.mxu0
        %v603 = vsel %vm530, %v512, 0
        %v605 = vsel %vm530, %v519, 0
        %607 = vmatpush.xpose.msra.mxu0 0.0
        %608 = vmatpush.xpose.msra.mxu0 0.0
        %609 = vmatpush.xpose.msra.mxu0 0.0
        %610 = vmatpush.xpose.msra.mxu0 0.0
        %611 = vmatpush.xpose.msra.mxu0 0.0
        %612 = vmatpush.xpose.msra.mxu0 0.0
        %613 = vmatpush.xpose.msra.mxu0 0.0
        %614 = vmatpush.xpose.msra.mxu0 0.0
        %615 = vmatpush.xpose.msra.mxu0 0.0
        %616 = vmatpush.xpose.msra.mxu0 0.0
        %617 = vmatpush.xpose.msra.mxu0 0.0
        %618 = vmatpush.xpose.msra.mxu0 0.0
        %619 = vmatpush.xpose.msra.mxu0 0.0
        %620 = vmatpush.xpose.msra.mxu0 0.0
        %621 = vmatpush.xpose.msra.mxu0 0.0
        %622 = vmatpush.xpose.msra.mxu0 %v605
        %623 = vmatmul.f32.gmra.mxu0 %v603
        %v624 = vpop.f32.mrf.mxu0
        %v625 = vadd.f32 0.0, %v624
        %626 = vdwg.mxu0
        %v627 = vsel %vm530, %v553, -inf
        %628 = vmax.xlane.f32.xlu0 %v627
        %v629 = vpop.xlane.xlu0 %628
        %v630 = vsel %vm530, %v577, -inf
        %631 = vmax.xlane.f32.xlu0 %v630
        %v632 = vpop.xlane.xlu0 %631
        %v633 = vsel %vm530, %v601, -inf
        %634 = vmax.xlane.f32.xlu0 %v633
        %v635 = vpop.xlane.xlu0 %634
        %v636 = vsel %vm530, %v625, -inf
        %637 = vmax.xlane.f32.xlu0 %v636
        %v638 = vpop.xlane.xlu0 %637
        %v639 = vsub.f32 %v553, %v629
        %v640 = vsub.f32 %v577, %v632
        %v641 = vsub.f32 %v601, %v635
        %v642 = vsub.f32 %v625, %v638
        %v643 = vmul.f32 %v639, 1.442695
        %v644 = vpow.pop %v643
        %v645 = vmul.f32 %v640, 1.442695
        %v646 = vpow.pop %v645
        %v647 = vmul.f32 %v641, 1.442695
        %v648 = vpow.pop %v647
        %v649 = vmul.f32 %v642, 1.442695
        %v650 = vpow.pop %v649
        %v651 = vsel %vm530, %v644, 0.0
        %652 = vadd.xlane.f32.xlu0 %v651
        %v653 = vpop.xlane.xlu0 %652
        %v654 = vsel %vm530, %v646, 0.0
        %655 = vadd.xlane.f32.xlu0 %v654
        %v656 = vpop.xlane.xlu0 %655
        %v657 = vsel %vm530, %v648, 0.0
        %658 = vadd.xlane.f32.xlu0 %v657
        %v659 = vpop.xlane.xlu0 %658
        %v660 = vsel %vm530, %v650, 0.0
        %661 = vadd.xlane.f32.xlu0 %v660
        %v662 = vpop.xlane.xlu0 %661
        %v663 = vrcp.pop %v653
        %v664 = vrcp.pop %v656
        %v665 = vrcp.pop %v659
        %v666 = vrcp.pop %v662
        %v667 = vmul.f32 %v644, %v663
        %v668 = vmul.f32 %v646, %v664
        %v669 = vmul.f32 %v648, %v665
        %v670 = vmul.f32 %v650, %v666
        %v672 = vsel %vm530, %v667, 0
        %674 = vmatpush.msra.mxu0 0.0
        %675 = vmatpush.msra.mxu0 0.0
        %676 = vmatpush.msra.mxu0 0.0
        %677 = vmatpush.msra.mxu0 0.0
        %678 = vmatpush.msra.mxu0 0.0
        %679 = vmatpush.msra.mxu0 0.0
        %680 = vmatpush.msra.mxu0 0.0
        %681 = vmatpush.msra.mxu0 0.0
        %682 = vmatpush.msra.mxu0 0.0
        %683 = vmatpush.msra.mxu0 0.0
        %684 = vmatpush.msra.mxu0 0.0
        %685 = vmatpush.msra.mxu0 0.0
        %686 = vmatpush.msra.mxu0 0.0
        %687 = vmatpush.msra.mxu0 0.0
        %688 = vmatpush.msra.mxu0 0.0
        %689 = vmatpush.msra.mxu0 %v504
        %690 = vmatmul.f32.gmra.mxu0 %v672
        %v691 = vpop.f32.mrf.mxu0
        %v692 = vadd.f32 0.0, %v691
        %693 = vdwg.mxu0
        %v695 = vsel %vm530, %v668, 0
        %697 = vmatpush.msra.mxu0 0.0
        %698 = vmatpush.msra.mxu0 0.0
        %699 = vmatpush.msra.mxu0 0.0
        %700 = vmatpush.msra.mxu0 0.0
        %701 = vmatpush.msra.mxu0 0.0
        %702 = vmatpush.msra.mxu0 0.0
        %703 = vmatpush.msra.mxu0 0.0
        %704 = vmatpush.msra.mxu0 0.0
        %705 = vmatpush.msra.mxu0 0.0
        %706 = vmatpush.msra.mxu0 0.0
        %707 = vmatpush.msra.mxu0 0.0
        %708 = vmatpush.msra.mxu0 0.0
        %709 = vmatpush.msra.mxu0 0.0
        %710 = vmatpush.msra.mxu0 0.0
        %711 = vmatpush.msra.mxu0 0.0
        %712 = vmatpush.msra.mxu0 %v522
        %713 = vmatmul.f32.gmra.mxu0 %v695
        %v714 = vpop.f32.mrf.mxu0
        %v715 = vadd.f32 0.0, %v714
        %716 = vdwg.mxu0
        %v718 = vsel %vm530, %v669, 0
        %720 = vmatpush.msra.mxu0 0.0
        %721 = vmatpush.msra.mxu0 0.0
        %722 = vmatpush.msra.mxu0 0.0
        %723 = vmatpush.msra.mxu0 0.0
        %724 = vmatpush.msra.mxu0 0.0
        %725 = vmatpush.msra.mxu0 0.0
        %726 = vmatpush.msra.mxu0 0.0
        %727 = vmatpush.msra.mxu0 0.0
        %728 = vmatpush.msra.mxu0 0.0
        %729 = vmatpush.msra.mxu0 0.0
        %730 = vmatpush.msra.mxu0 0.0
        %731 = vmatpush.msra.mxu0 0.0
        %732 = vmatpush.msra.mxu0 0.0
        %733 = vmatpush.msra.mxu0 0.0
        %734 = vmatpush.msra.mxu0 0.0
        %735 = vmatpush.msra.mxu0 %v525
        %736 = vmatmul.f32.gmra.mxu0 %v718
        %v737 = vpop.f32.mrf.mxu0
        %v738 = vadd.f32 0.0, %v737
        %739 = vdwg.mxu0
        %v741 = vsel %vm530, %v670, 0
        %743 = vmatpush.msra.mxu0 0.0
        %744 = vmatpush.msra.mxu0 0.0
        %745 = vmatpush.msra.mxu0 0.0
        %746 = vmatpush.msra.mxu0 0.0
        %747 = vmatpush.msra.mxu0 0.0
        %748 = vmatpush.msra.mxu0 0.0
        %749 = vmatpush.msra.mxu0 0.0
        %750 = vmatpush.msra.mxu0 0.0
        %751 = vmatpush.msra.mxu0 0.0
        %752 = vmatpush.msra.mxu0 0.0
        %753 = vmatpush.msra.mxu0 0.0
        %754 = vmatpush.msra.mxu0 0.0
        %755 = vmatpush.msra.mxu0 0.0
        %756 = vmatpush.msra.mxu0 0.0
        %757 = vmatpush.msra.mxu0 0.0
        %758 = vmatpush.msra.mxu0 %v528
        %759 = vmatmul.f32.gmra.mxu0 %v741
        %v760 = vpop.f32.mrf.mxu0
        %v761 = vadd.f32 0.0, %v760
        %762 = vdwg.mxu0
        %764 = vrot.lane.b32.xlu0 %v715, 8
        %v765 = vpop.permute.xlu0 %764
        %768 = vrot.lane.b32.xlu0 %v738, 16
        %v769 = vpop.permute.xlu0 %768
        %772 = vrot.lane.b32.xlu0 %v761, 24
        %v773 = vpop.permute.xlu0 %772
        %v775 = vsel %vm530, %v692, %v765
        %vm776 = vcmask 130048
        %v777 = vsel %vm776, %v775, %v769
        %vm778 = vcmask 195584
        %v779 = vsel %vm778, %v777, %v773
        %v780 = vld [vmem:[#allocation10] sm:$0xff]
        %v781 = vld [vmem:[#allocation10 + $0x8] sm:$0xff]
        %v782 = vld [vmem:[#allocation10 + $0x10] sm:$0xff]
        %v783 = vld [vmem:[#allocation10 + $0x18] sm:$0xff]
        %v784 = vld [vmem:[%s6] sm:$0x1]
        %v786 = vperm.slane %v784, 0
        %v789 = vsel %vm413, %v779, 0
        %791 = vmatpush.msra.mxu0 0.0
        %792 = vmatpush.msra.mxu0 0.0
        %793 = vmatpush.msra.mxu0 0.0
        %794 = vmatpush.msra.mxu0 0.0
        %795 = vmatpush.msra.mxu0 0.0
        %796 = vmatpush.msra.mxu0 0.0
        %797 = vmatpush.msra.mxu0 0.0
        %798 = vmatpush.msra.mxu0 0.0
        %799 = vmatpush.msra.mxu0 0.0
        %800 = vmatpush.msra.mxu0 0.0
        %801 = vmatpush.msra.mxu0 0.0
        %802 = vmatpush.msra.mxu0 0.0
        %803 = vmatpush.msra.mxu0 %v783
        %804 = vmatpush.msra.mxu0 %v782
        %805 = vmatpush.msra.mxu0 %v781
        %806 = vmatpush.msra.mxu0 %v780
        %807 = vmatmul.f32.gmra.mxu0 %v789
        %v808 = vpop.f32.mrf.mxu0
        %v809 = vadd.f32 %v786, %v808
        %810 = vdwg.mxu0
        %811 = vst.msk [vmem:[%s403] sm:$0xff] %vm413, %v809
        %s812 = sand.u32 %s198, 1
        %s813 = scalar_lea.sflag [#allocation4], %s812
        %s814 = sand.u32 %s198, 1
        %s815 = smul.addr %s814, 8
        %s816 = scalar_lea.vmem [#allocation11], %s815
        // Predicated region
        $region69: #{tpu_custom_call.1} parent=47 // pred_check
          %p817 = pneg %p208
        $region70: #{tpu_custom_call.1} parent=47 // pred_check_branch
          %819 = sbr.rel (%p817) target = $region72
        $region71: #{tpu_custom_call.1} parent=47 // pred_region
          %821 = vsyncadd %s813, 0
          %s822 = smul.addr %s28, 8
          %s823 = scalar_lea.hbm %s7, %s822
          %s825 = sshll.u32 %s816, 4
          %s826 = int_to_ptr.vmem [resolvable:$true] %s825
          %s827 = sshll.u32 %s823, 4
          %s828 = int_to_ptr.hbm [resolvable:$true] %s827
          %830 = dma.vmem_to_hbm [thread:$0]  %s826, 128, %s828, %s813
        $region72: #{tpu_custom_call.1} parent=47 // pred_fallthru
          _
      $region48: #{tpu_custom_call.1} parent=5 // pred_fallthru
        _
      %p831 = scmp.le.s32.totalorder 2, %s23
      // Predicated region
      $region73: #{tpu_custom_call.1} parent=5 // pred_check
        %p832 = pneg %p831
      $region74: #{tpu_custom_call.1} parent=5 // pred_check_branch
        %834 = sbr.rel (%p832) target = $region76
      $region75: #{tpu_custom_call.1} parent=5 // pred_region
        %s835 = ssub.s32 %s23, 2
        // Predicated region
        $region77: #{tpu_custom_call.1} parent=75 // pred_check
          %p836 = pneg %p214
        $region78: #{tpu_custom_call.1} parent=75 // pred_check_branch
          %838 = sbr.rel (%p836) target = $region80
        $region79: #{tpu_custom_call.1} parent=75 // pred_region
          %s839 = sand.u32 %s199, 1
          %s840 = scalar_lea.sflag [#allocation4], %s839
          %s841 = sand.u32 %s199, 1
          %s842 = smul.addr %s841, 8
          %s843 = scalar_lea.vmem [#allocation11], %s842
          %845 = dma.done %s840, 128
        $region80: #{tpu_custom_call.1} parent=75 // pred_fallthru
          _
      $region76: #{tpu_custom_call.1} parent=5 // pred_fallthru
        _
    $region6: #{tpu_custom_call.1} parent=1 // loop_footer
      %s27 = sadd.s32 1, %s23
    $region7: #{tpu_custom_call.1} parent=1 // loop_footer_branch
      %22 = sbr.rel target = $region3
    $region8: #{tpu_custom_call.1} parent=1 // loop_exit
      _
    %846 = vsyncpa [#allocation3], 1
    %s847 = scalar_lea.sflag [#allocation3], 1
    %848 = vsyncpa %s847, 1
    %849 = vsyncpa [#allocation6], 1
    %s850 = scalar_lea.sflag [#allocation6], 1
    %851 = vsyncpa %s850, 1
    %852 = vsyncpa [#allocation9], 1
    %853 = vsyncpa [#allocation4], 1
    %s854 = scalar_lea.sflag [#allocation4], 1
    %855 = vsyncpa %s854, 1

</llo_original>
